<compile_context>
chip_gen: v7x
topology: tpu7x:2x2x1
jax: 0.10.0
libtpu: 0.0.40
codegen_flags: <defaults>
</compile_context>

<pallas_src>
import jax
import jax.numpy as jnp
import numpy as np
from jax.experimental import pallas as pl
from jax.experimental.pallas import tpu as pltpu

TEMPERATURE = 0.1
BASE_TEMPERATURE = 0.07
IGNORE_LABEL = 92
FINAL_SCALE = 0.1


def _cc_loss_kernel(fq_ref, fk_ref, labq_ref, labk_ref, out_ref,
                    m_ref, l_ref, s_ref, n_ref):
    qi = pl.program_id(0)
    kj = pl.program_id(1)
    n_kj = pl.num_programs(1)

    @pl.when(kj == 0)
    def _init():
        m_ref[...] = jnp.full(m_ref.shape, -jnp.inf, dtype=jnp.float32)
        l_ref[...] = jnp.zeros(l_ref.shape, jnp.float32)
        s_ref[...] = jnp.zeros(s_ref.shape, jnp.float32)
        n_ref[...] = jnp.zeros(n_ref.shape, jnp.float32)

    # Features were pre-scaled by 1/sqrt(T) in the wrapper, so one MXU
    # contraction (last dims of both operands; no transposed copy) directly
    # yields sim = f.f^T / T.
    sim = jax.lax.dot_general(
        fq_ref[...], fk_ref[...],
        dimension_numbers=(((1,), (1,)), ((), ())),
        preferred_element_type=jnp.float32)                  # (TQ, TK)

    # Running max over ALL columns (diag / ignored / padded included), exactly
    # like torch.max(anchor_dot_contrast, dim=1); the shift cancels in the
    # final decomposition, so padded zero columns are harmless.
    blk_max = jnp.max(sim, axis=1, keepdims=True)            # (TQ, 1)
    m_old = m_ref[...]
    m_new = jnp.maximum(m_old, blk_max)
    alpha = jnp.exp(m_old - m_new)                           # 0 on first step

    lab_q = labq_ref[...]                                    # (TQ, 1) int32
    lab_k = labk_ref[...]                                    # (1, TK) int32
    valid_col = lab_k != IGNORE_LABEL                        # (1, TK) bool
    same_lab = lab_q == lab_k                                # (TQ, TK) bool

    def _accumulate(valid):
        # valid: boolean logits_mask for this block (broadcasts over rows).
        p = jnp.where(valid, jnp.exp(sim - m_new), 0.0)
        pos_f = jnp.where(jnp.logical_and(valid, same_lab), 1.0, 0.0)
        l_ref[...] = alpha * l_ref[...] + jnp.sum(p, axis=1, keepdims=True)
        s_ref[...] = s_ref[...] + jnp.sum(pos_f * sim, axis=1, keepdims=True)
        n_ref[...] = n_ref[...] + jnp.sum(pos_f, axis=1, keepdims=True)

    # Off-diagonal blocks never contain the global diagonal (square, uniform
    # blocking) -> skip the iota mask entirely on those steps.
    @pl.when(qi != kj)
    def _off_diag():
        _accumulate(valid_col)

    @pl.when(qi == kj)
    def _diag():
        ri = jax.lax.broadcasted_iota(jnp.int32, sim.shape, 0)
        ci = jax.lax.broadcasted_iota(jnp.int32, sim.shape, 1)
        _accumulate(jnp.logical_and(ri != ci, valid_col))

    m_ref[...] = m_new

    @pl.when(kj == n_kj - 1)
    def _finalize():
        n_pos = n_ref[...]
        # sum_j pos*log_prob = sum_j pos*sim - n_pos*(rowmax + log(denom)).
        # A row with zero valid contrast columns gives 0*(-inf)=NaN, matching
        # the PyTorch reference.
        row_term = s_ref[...] - n_pos * (m_ref[...] + jnp.log(l_ref[...]))
        mlpp = row_term / (n_pos + 1e-12)
        per_row = (-(TEMPERATURE / BASE_TEMPERATURE)) * mlpp  # (TQ, 1)
        # Lane-dense write (broadcast across 128 lanes); wrapper reads col 0.
        out_ref[...] = jnp.broadcast_to(per_row, out_ref.shape)


def _round_up(x, m):
    return ((x + m - 1) // m) * m


def _pick_tile(b):
    """Row/contrast tile size.

    Big enough to amortize the ~0.35us per-grid-step overhead and cut the
    n_blk-fold HBM re-read of the contrast rows, capped at 512 so the
    (tile,tile) f32 temporaries stay comfortably inside v7x's 64 MiB VMEM,
    and sized so there are >= 2 row blocks whenever possible (feeds both
    TensorCores on v7x via the "parallel" qi axis).
    """
    b128 = _round_up(b, 128)
    if b128 <= 256:
        return b128                            # single tile
    if b128 <= 1024:
        return _round_up(b128, 256) // 2       # 2 row blocks, multiple of 128
    return 512


@jax.jit
def cc_loss(outputs, targets):
    """outputs: (N, T, C) float; targets: (N, T) int -> scalar loss."""
    N, T, C = outputs.shape
    B = N * T
    feat = outputs.reshape(B, C).astype(jnp.float32)
    lab = targets.reshape(B).astype(jnp.int32)

    tile = _pick_tile(B)
    Bp = _round_up(B, tile)
    Cp = _round_up(C, 128)
    n_blk = Bp // tile

    # Fold 1/T into the features once: both matmul operands come from the same
    # array, so scaling by 1/sqrt(T) makes the kernel's dot emit sim/T
    # directly (no per-step rescale).  Zero feature padding is inert for the
    # dot; padded labels carry IGNORE_LABEL so padded columns are masked out
    # and padded rows contribute nothing (sliced away below).
    inv_sqrt_t = 1.0 / float(np.sqrt(TEMPERATURE))
    feat_p = jnp.zeros((Bp, Cp), jnp.float32).at[:B, :C].set(feat * inv_sqrt_t)
    lab_p = jnp.full((Bp,), IGNORE_LABEL, jnp.int32).at[:B].set(lab)
    lab_col = lab_p.reshape(Bp, 1)
    lab_row = lab_p.reshape(1, Bp)

    grid_spec = pltpu.PrefetchScalarGridSpec(
        num_scalar_prefetch=0,
        grid=(n_blk, n_blk),
        in_specs=[
            pl.BlockSpec((tile, Cp), lambda qi, kj: (qi, 0)),   # anchor rows
            pl.BlockSpec((tile, Cp), lambda qi, kj: (kj, 0)),   # contrast rows
            pl.BlockSpec((tile, 1), lambda qi, kj: (qi, 0)),    # row labels
            pl.BlockSpec((1, tile), lambda qi, kj: (0, kj)),    # col labels
        ],
        out_specs=pl.BlockSpec((tile, 128), lambda qi, kj: (qi, 0)),
        scratch_shapes=[pltpu.VMEM((tile, 1), jnp.float32)] * 4,  # m, l, s, n
    )

    per_row = pl.pallas_call(
        _cc_loss_kernel,
        out_shape=jax.ShapeDtypeStruct((Bp, 128), jnp.float32),
        grid_spec=grid_spec,
        compiler_params=pltpu.CompilerParams(
            dimension_semantics=("parallel", "arbitrary"),
            vmem_limit_bytes=64 * 1024 * 1024),
    )(feat_p, feat_p, lab_col, lab_row)

    # Mean over the true B anchors only (padded rows sliced away), then 0.1x.
    return FINAL_SCALE * jnp.sum(per_row[:B, 0]) / jnp.float32(B)


def cc_loss_ref(outputs, targets):
    """Pure-JAX reference mirroring the PyTorch code path."""
    N, T, C = outputs.shape
    B = N * T
    f = outputs.reshape(B, C).astype(jnp.float32)
    lab = targets.reshape(B).astype(jnp.int32)

    sim = (f @ f.T) / TEMPERATURE
    logits = sim - jnp.max(sim, axis=1, keepdims=True)
    eye = jnp.eye(B, dtype=jnp.float32)
    valid_col = (lab[None, :] != IGNORE_LABEL).astype(jnp.float32)
    logits_mask = (1.0 - eye) * valid_col
    mask = (lab[:, None] == lab[None, :]).astype(jnp.float32)
    mask = mask * valid_col
    mask = mask * logits_mask
    exp_logits = jnp.exp(logits) * logits_mask
    log_prob = logits - jnp.log(jnp.sum(exp_logits, axis=1, keepdims=True))
    mlpp = jnp.sum(mask * log_prob, axis=1) / (jnp.sum(mask, axis=1) + 1e-12)
    loss = -(TEMPERATURE / BASE_TEMPERATURE) * mlpp
    return FINAL_SCALE * jnp.mean(loss)


def _make_inputs(key, N, T, C, n_classes):
    k1, k2 = jax.random.split(key)
    feats = jax.random.normal(k1, (N, T, C), dtype=jnp.float32)
    # L2-normalize feature vectors (standard SupCon setting; keeps sim/T
    # bounded so exp() neither under- nor over-flows in f32).
    feats = feats / jnp.linalg.norm(feats, axis=-1, keepdims=True)
    targets = jax.random.randint(k2, (N, T), 0, n_classes, dtype=jnp.int32)
    # Exercise the ignore-label (92) column masking on a couple of positions.
    targets = targets.at[0, -1].set(IGNORE_LABEL)
    targets = targets.at[-1, 0].set(IGNORE_LABEL)
    return feats, targets


if __name__ == "__main__":
    key = jax.random.PRNGKey(0)
    k_small, k_mid, k_big = jax.random.split(key, 3)

    # Small case: B = N*T = 16 -> single (128,128) tile; only the diagonal
    # branch of the kernel runs.
    outputs, targets = _make_inputs(k_small, N=2, T=8, C=32, n_classes=5)
    loss = jax.block_until_ready(cc_loss(outputs, targets))
    ref = jax.block_until_ready(cc_loss_ref(outputs, targets))
    assert np.isfinite(float(loss)), "loss is not finite"
    np.testing.assert_allclose(np.asarray(loss), np.asarray(ref),
                               rtol=1e-4, atol=1e-6)

    # Multi-tile case: B = 300 -> padded to 512, tile 256, grid (2, 2):
    # exercises the flash accumulation, both diag/off-diag branches and
    # row/column padding.
    outputs2, targets2 = _make_inputs(k_mid, N=3, T=100, C=48, n_classes=6)
    loss2 = jax.block_until_ready(cc_loss(outputs2, targets2))
    ref2 = jax.block_until_ready(cc_loss_ref(outputs2, targets2))
    assert np.isfinite(float(loss2)), "loss (multi-tile) is not finite"
    np.testing.assert_allclose(np.asarray(loss2), np.asarray(ref2),
                               rtol=1e-4, atol=1e-6)

    # Larger case: B = 1152 -> tile = 512, grid (3, 3): exercises the raised
    # tile-size path from the perf review (slightly looser rtol for the
    # longer f32 reductions).
    outputs3, targets3 = _make_inputs(k_big, N=4, T=288, C=64, n_classes=8)
    loss3 = jax.block_until_ready(cc_loss(outputs3, targets3))
    ref3 = jax.block_until_ready(cc_loss_ref(outputs3, targets3))
    assert np.isfinite(float(loss3)), "loss (tile=512) is not finite"
    np.testing.assert_allclose(np.asarray(loss3), np.asarray(ref3),
                               rtol=2e-4, atol=1e-6)

    print("KERNEL_OK")
</pallas_src>

<mosaic_0001>
module attributes {stable_mosaic.version = 11 : i64} {
  func.func @_cc_loss_kernel(%arg0: i32, %arg1: i32, %arg2: memref<128x128xf32, #tpu.memory_space<vmem>>, %arg3: memref<128x128xf32, #tpu.memory_space<vmem>>, %arg4: memref<128x1xi32, #tpu.memory_space<vmem>>, %arg5: memref<1x128xi32, #tpu.memory_space<vmem>>, %arg6: memref<128x128xf32, #tpu.memory_space<vmem>>, %arg7: memref<128x1xf32, #tpu.memory_space<vmem>>, %arg8: memref<128x1xf32, #tpu.memory_space<vmem>>, %arg9: memref<128x1xf32, #tpu.memory_space<vmem>>, %arg10: memref<128x1xf32, #tpu.memory_space<vmem>>) attributes {dimension_semantics = [#tpu.dimension_semantics<parallel>, #tpu.dimension_semantics<arbitrary>], iteration_bounds = array<i64: 1, 1>, scalar_prefetch = 0 : i64, scratch_operands = 4 : i64, tpu.core_type = #tpu.core_type<tc>, window_params = [{transform_indices = @transform_0, window_bounds = array<i64: 128, 128>}, {transform_indices = @transform_1, window_bounds = array<i64: 128, 128>}, {transform_indices = @transform_2, window_bounds = array<i64: 128, 1>}, {transform_indices = @transform_3, window_bounds = array<i64: 1, 128>}, {transform_indices = @transform_4, window_bounds = array<i64: 128, 128>}]} {
    %c0_i32 = arith.constant 0 : i32
    %0 = arith.cmpi eq, %arg1, %c0_i32 : i32
    %1 = arith.extui %0 : i1 to i32
    %c0_i32_0 = arith.constant 0 : i32
    %2 = arith.cmpi ne, %1, %c0_i32_0 : i32
    scf.if %2 {
      %cst_17 = arith.constant 0xFF800000 : f32
      %29 = vector.broadcast %cst_17 : f32 to vector<128x1xf32>
      %c0_18 = arith.constant 0 : index
      %c0_19 = arith.constant 0 : index
      %30 = vector.load %arg7[%c0_18, %c0_19] : memref<128x1xf32, #tpu.memory_space<vmem>>, vector<128x1xf32>
      tpu.vector_store %arg7[%c0_18, %c0_19], %29 {strides = array<i32>} : memref<128x1xf32, #tpu.memory_space<vmem>>, vector<128x1xf32>,
      %cst_20 = arith.constant 0.000000e+00 : f32
      %31 = vector.broadcast %cst_20 : f32 to vector<128x1xf32>
      %c0_21 = arith.constant 0 : index
      %c0_22 = arith.constant 0 : index
      %32 = vector.load %arg8[%c0_21, %c0_22] : memref<128x1xf32, #tpu.memory_space<vmem>>, vector<128x1xf32>
      tpu.vector_store %arg8[%c0_21, %c0_22], %31 {strides = array<i32>} : memref<128x1xf32, #tpu.memory_space<vmem>>, vector<128x1xf32>,
      %cst_23 = arith.constant 0.000000e+00 : f32
      %33 = vector.broadcast %cst_23 : f32 to vector<128x1xf32>
      %c0_24 = arith.constant 0 : index
      %c0_25 = arith.constant 0 : index
      %34 = vector.load %arg9[%c0_24, %c0_25] : memref<128x1xf32, #tpu.memory_space<vmem>>, vector<128x1xf32>
      tpu.vector_store %arg9[%c0_24, %c0_25], %33 {strides = array<i32>} : memref<128x1xf32, #tpu.memory_space<vmem>>, vector<128x1xf32>,
      %cst_26 = arith.constant 0.000000e+00 : f32
      %35 = vector.broadcast %cst_26 : f32 to vector<128x1xf32>
      %c0_27 = arith.constant 0 : index
      %c0_28 = arith.constant 0 : index
      %36 = vector.load %arg10[%c0_27, %c0_28] : memref<128x1xf32, #tpu.memory_space<vmem>>, vector<128x1xf32>
      tpu.vector_store %arg10[%c0_27, %c0_28], %35 {strides = array<i32>} : memref<128x1xf32, #tpu.memory_space<vmem>>, vector<128x1xf32>,
    } else {
    }
    %c0 = arith.constant 0 : index
    %c0_1 = arith.constant 0 : index
    %3 = vector.load %arg2[%c0, %c0_1] : memref<128x128xf32, #tpu.memory_space<vmem>>, vector<128x128xf32>
    %c0_2 = arith.constant 0 : index
    %c0_3 = arith.constant 0 : index
    %4 = vector.load %arg3[%c0_2, %c0_3] : memref<128x128xf32, #tpu.memory_space<vmem>>, vector<128x128xf32>
    %cst = arith.constant dense<0.000000e+00> : vector<128x128xf32>
    %5 = tpu.matmul %3, %4, %cst {dimension_numbers = #tpu.dot_dimension_numbers<[1], [1], [0], [0], [0, 0, 1, 0], [], []>} : vector<128x128xf32>, vector<128x128xf32>, vector<128x128xf32> -> vector<128x128xf32>
    %cst_4 = arith.constant dense<0xFF800000> : vector<128xf32>
    %6 = vector.multi_reduction <maximumf>, %5, %cst_4 [1] : vector<128x128xf32> to vector<128xf32>
    %7 = vector.shape_cast %6 : vector<128xf32> to vector<128x1xf32>
    %c0_5 = arith.constant 0 : index
    %c0_6 = arith.constant 0 : index
    %8 = vector.load %arg7[%c0_5, %c0_6] : memref<128x1xf32, #tpu.memory_space<vmem>>, vector<128x1xf32>
    %9 = arith.maximumf %8, %7 : vector<128x1xf32>
    %10 = arith.subf %8, %9 : vector<128x1xf32>
    %11 = math.exp %10 : vector<128x1xf32>
    %c0_7 = arith.constant 0 : index
    %c0_8 = arith.constant 0 : index
    %12 = vector.load %arg4[%c0_7, %c0_8] : memref<128x1xi32, #tpu.memory_space<vmem>>, vector<128x1xi32>
    %c0_9 = arith.constant 0 : index
    %c0_10 = arith.constant 0 : index
    %13 = vector.load %arg5[%c0_9, %c0_10] : memref<1x128xi32, #tpu.memory_space<vmem>>, vector<1x128xi32>
    %c92_i32 = arith.constant 92 : i32
    %14 = vector.broadcast %c92_i32 : i32 to vector<1x128xi32>
    %15 = arith.cmpi ne, %13, %14 : vector<1x128xi32>
    %16 = vector.broadcast %12 : vector<128x1xi32> to vector<128x128xi32>
    %17 = vector.broadcast %13 : vector<1x128xi32> to vector<128x128xi32>
    %18 = arith.cmpi eq, %16, %17 : vector<128x128xi32>
    %19 = arith.cmpi ne, %arg0, %arg1 : i32
    %20 = arith.extui %19 : i1 to i32
    %c0_i32_11 = arith.constant 0 : i32
    %21 = arith.cmpi ne, %20, %c0_i32_11 : i32
    scf.if %21 {
      %29 = vector.broadcast %9 : vector<128x1xf32> to vector<128x128xf32>
      %30 = arith.subf %5, %29 : vector<128x128xf32>
      %31 = math.exp %30 : vector<128x128xf32>
      %cst_17 = arith.constant 0.000000e+00 : f32
      %32 = vector.shape_cast %15 : vector<1x128xi1> to vector<1x128xi1>
      %33 = vector.broadcast %32 : vector<1x128xi1> to vector<128x128xi1>
      %34 = vector.broadcast %cst_17 : f32 to vector<128x128xf32>
      %35 = arith.select %33, %31, %34 : vector<128x128xi1>, vector<128x128xf32>
      %36 = vector.broadcast %15 : vector<1x128xi1> to vector<128x128xi1>
      %37 = arith.andi %36, %18 : vector<128x128xi1>
      %cst_18 = arith.constant 1.000000e+00 : f32
      %cst_19 = arith.constant 0.000000e+00 : f32
      %38 = vector.broadcast %cst_18 : f32 to vector<128x128xf32>
      %39 = vector.broadcast %cst_19 : f32 to vector<128x128xf32>
      %40 = arith.select %37, %38, %39 : vector<128x128xi1>, vector<128x128xf32>
      %c0_20 = arith.constant 0 : index
      %c0_21 = arith.constant 0 : index
      %41 = vector.load %arg8[%c0_20, %c0_21] : memref<128x1xf32, #tpu.memory_space<vmem>>, vector<128x1xf32>
      %42 = arith.mulf %11, %41 : vector<128x1xf32>
      %cst_22 = arith.constant dense<0.000000e+00> : vector<128xf32>
      %43 = vector.multi_reduction <add>, %35, %cst_22 [1] : vector<128x128xf32> to vector<128xf32>
      %44 = vector.shape_cast %43 : vector<128xf32> to vector<128x1xf32>
      %45 = arith.addf %42, %44 : vector<128x1xf32>
      %c0_23 = arith.constant 0 : index
      %c0_24 = arith.constant 0 : index
      %46 = vector.load %arg8[%c0_23, %c0_24] : memref<128x1xf32, #tpu.memory_space<vmem>>, vector<128x1xf32>
      tpu.vector_store %arg8[%c0_23, %c0_24], %45 {strides = array<i32>} : memref<128x1xf32, #tpu.memory_space<vmem>>, vector<128x1xf32>,
      %c0_25 = arith.constant 0 : index
      %c0_26 = arith.constant 0 : index
      %47 = vector.load %arg9[%c0_25, %c0_26] : memref<128x1xf32, #tpu.memory_space<vmem>>, vector<128x1xf32>
      %48 = arith.mulf %40, %5 : vector<128x128xf32>
      %cst_27 = arith.constant dense<0.000000e+00> : vector<128xf32>
      %49 = vector.multi_reduction <add>, %48, %cst_27 [1] : vector<128x128xf32> to vector<128xf32>
      %50 = vector.shape_cast %49 : vector<128xf32> to vector<128x1xf32>
      %51 = arith.addf %47, %50 : vector<128x1xf32>
      %c0_28 = arith.constant 0 : index
      %c0_29 = arith.constant 0 : index
      %52 = vector.load %arg9[%c0_28, %c0_29] : memref<128x1xf32, #tpu.memory_space<vmem>>, vector<128x1xf32>
      tpu.vector_store %arg9[%c0_28, %c0_29], %51 {strides = array<i32>} : memref<128x1xf32, #tpu.memory_space<vmem>>, vector<128x1xf32>,
      %c0_30 = arith.constant 0 : index
      %c0_31 = arith.constant 0 : index
      %53 = vector.load %arg10[%c0_30, %c0_31] : memref<128x1xf32, #tpu.memory_space<vmem>>, vector<128x1xf32>
      %cst_32 = arith.constant dense<0.000000e+00> : vector<128xf32>
      %54 = vector.multi_reduction <add>, %40, %cst_32 [1] : vector<128x128xf32> to vector<128xf32>
      %55 = vector.shape_cast %54 : vector<128xf32> to vector<128x1xf32>
      %56 = arith.addf %53, %55 : vector<128x1xf32>
      %c0_33 = arith.constant 0 : index
      %c0_34 = arith.constant 0 : index
      %57 = vector.load %arg10[%c0_33, %c0_34] : memref<128x1xf32, #tpu.memory_space<vmem>>, vector<128x1xf32>
      tpu.vector_store %arg10[%c0_33, %c0_34], %56 {strides = array<i32>} : memref<128x1xf32, #tpu.memory_space<vmem>>, vector<128x1xf32>,
    } else {
    }
    %22 = arith.cmpi eq, %arg0, %arg1 : i32
    %23 = arith.extui %22 : i1 to i32
    %c0_i32_12 = arith.constant 0 : i32
    %24 = arith.cmpi ne, %23, %c0_i32_12 : i32
    scf.if %24 {
      %29 = tpu.iota {dimensions = array<i32: 0>} : vector<128x128xi32>
      %30 = tpu.iota {dimensions = array<i32: 1>} : vector<128x128xi32>
      %31 = arith.cmpi ne, %29, %30 : vector<128x128xi32>
      %32 = vector.broadcast %15 : vector<1x128xi1> to vector<128x128xi1>
      %33 = arith.andi %31, %32 : vector<128x128xi1>
      %34 = vector.broadcast %9 : vector<128x1xf32> to vector<128x128xf32>
      %35 = arith.subf %5, %34 : vector<128x128xf32>
      %36 = math.exp %35 : vector<128x128xf32>
      %cst_17 = arith.constant 0.000000e+00 : f32
      %37 = vector.broadcast %cst_17 : f32 to vector<128x128xf32>
      %38 = arith.select %33, %36, %37 : vector<128x128xi1>, vector<128x128xf32>
      %39 = arith.andi %33, %18 : vector<128x128xi1>
      %cst_18 = arith.constant 1.000000e+00 : f32
      %cst_19 = arith.constant 0.000000e+00 : f32
      %40 = vector.broadcast %cst_18 : f32 to vector<128x128xf32>
      %41 = vector.broadcast %cst_19 : f32 to vector<128x128xf32>
      %42 = arith.select %39, %40, %41 : vector<128x128xi1>, vector<128x128xf32>
      %c0_20 = arith.constant 0 : index
      %c0_21 = arith.constant 0 : index
      %43 = vector.load %arg8[%c0_20, %c0_21] : memref<128x1xf32, #tpu.memory_space<vmem>>, vector<128x1xf32>
      %44 = arith.mulf %11, %43 : vector<128x1xf32>
      %cst_22 = arith.constant dense<0.000000e+00> : vector<128xf32>
      %45 = vector.multi_reduction <add>, %38, %cst_22 [1] : vector<128x128xf32> to vector<128xf32>
      %46 = vector.shape_cast %45 : vector<128xf32> to vector<128x1xf32>
      %47 = arith.addf %44, %46 : vector<128x1xf32>
      %c0_23 = arith.constant 0 : index
      %c0_24 = arith.constant 0 : index
      %48 = vector.load %arg8[%c0_23, %c0_24] : memref<128x1xf32, #tpu.memory_space<vmem>>, vector<128x1xf32>
      tpu.vector_store %arg8[%c0_23, %c0_24], %47 {strides = array<i32>} : memref<128x1xf32, #tpu.memory_space<vmem>>, vector<128x1xf32>,
      %c0_25 = arith.constant 0 : index
      %c0_26 = arith.constant 0 : index
      %49 = vector.load %arg9[%c0_25, %c0_26] : memref<128x1xf32, #tpu.memory_space<vmem>>, vector<128x1xf32>
      %50 = arith.mulf %42, %5 : vector<128x128xf32>
      %cst_27 = arith.constant dense<0.000000e+00> : vector<128xf32>
      %51 = vector.multi_reduction <add>, %50, %cst_27 [1] : vector<128x128xf32> to vector<128xf32>
      %52 = vector.shape_cast %51 : vector<128xf32> to vector<128x1xf32>
      %53 = arith.addf %49, %52 : vector<128x1xf32>
      %c0_28 = arith.constant 0 : index
      %c0_29 = arith.constant 0 : index
      %54 = vector.load %arg9[%c0_28, %c0_29] : memref<128x1xf32, #tpu.memory_space<vmem>>, vector<128x1xf32>
      tpu.vector_store %arg9[%c0_28, %c0_29], %53 {strides = array<i32>} : memref<128x1xf32, #tpu.memory_space<vmem>>, vector<128x1xf32>,
      %c0_30 = arith.constant 0 : index
      %c0_31 = arith.constant 0 : index
      %55 = vector.load %arg10[%c0_30, %c0_31] : memref<128x1xf32, #tpu.memory_space<vmem>>, vector<128x1xf32>
      %cst_32 = arith.constant dense<0.000000e+00> : vector<128xf32>
      %56 = vector.multi_reduction <add>, %42, %cst_32 [1] : vector<128x128xf32> to vector<128xf32>
      %57 = vector.shape_cast %56 : vector<128xf32> to vector<128x1xf32>
      %58 = arith.addf %55, %57 : vector<128x1xf32>
      %c0_33 = arith.constant 0 : index
      %c0_34 = arith.constant 0 : index
      %59 = vector.load %arg10[%c0_33, %c0_34] : memref<128x1xf32, #tpu.memory_space<vmem>>, vector<128x1xf32>
      tpu.vector_store %arg10[%c0_33, %c0_34], %58 {strides = array<i32>} : memref<128x1xf32, #tpu.memory_space<vmem>>, vector<128x1xf32>,
    } else {
    }
    %c0_13 = arith.constant 0 : index
    %c0_14 = arith.constant 0 : index
    %25 = vector.load %arg7[%c0_13, %c0_14] : memref<128x1xf32, #tpu.memory_space<vmem>>, vector<128x1xf32>
    tpu.vector_store %arg7[%c0_13, %c0_14], %9 {strides = array<i32>} : memref<128x1xf32, #tpu.memory_space<vmem>>, vector<128x1xf32>,
    %c0_i32_15 = arith.constant 0 : i32
    %26 = arith.cmpi eq, %arg1, %c0_i32_15 : i32
    %27 = arith.extui %26 : i1 to i32
    %c0_i32_16 = arith.constant 0 : i32
    %28 = arith.cmpi ne, %27, %c0_i32_16 : i32
    scf.if %28 {
      %c0_17 = arith.constant 0 : index
      %c0_18 = arith.constant 0 : index
      %29 = vector.load %arg10[%c0_17, %c0_18] : memref<128x1xf32, #tpu.memory_space<vmem>>, vector<128x1xf32>
      %c0_19 = arith.constant 0 : index
      %c0_20 = arith.constant 0 : index
      %30 = vector.load %arg9[%c0_19, %c0_20] : memref<128x1xf32, #tpu.memory_space<vmem>>, vector<128x1xf32>
      %c0_21 = arith.constant 0 : index
      %c0_22 = arith.constant 0 : index
      %31 = vector.load %arg7[%c0_21, %c0_22] : memref<128x1xf32, #tpu.memory_space<vmem>>, vector<128x1xf32>
      %c0_23 = arith.constant 0 : index
      %c0_24 = arith.constant 0 : index
      %32 = vector.load %arg8[%c0_23, %c0_24] : memref<128x1xf32, #tpu.memory_space<vmem>>, vector<128x1xf32>
      %33 = math.log %32 : vector<128x1xf32>
      %34 = arith.addf %31, %33 : vector<128x1xf32>
      %35 = arith.mulf %29, %34 : vector<128x1xf32>
      %36 = arith.subf %30, %35 : vector<128x1xf32>
      %cst_25 = arith.constant 9.99999996E-13 : f32
      %37 = vector.broadcast %cst_25 : f32 to vector<128x1xf32>
      %38 = arith.addf %29, %37 : vector<128x1xf32>
      %39 = arith.divf %36, %38 : vector<128x1xf32>
      %cst_26 = arith.constant -1.42857146 : f32
      %40 = vector.broadcast %cst_26 : f32 to vector<128x1xf32>
      %41 = arith.mulf %40, %39 : vector<128x1xf32>
      %42 = vector.shape_cast %41 : vector<128x1xf32> to vector<128x1xf32>
      %43 = vector.broadcast %42 : vector<128x1xf32> to vector<128x128xf32>
      %c0_27 = arith.constant 0 : index
      %c0_28 = arith.constant 0 : index
      %44 = vector.load %arg6[%c0_27, %c0_28] : memref<128x128xf32, #tpu.memory_space<vmem>>, vector<128x128xf32>
      tpu.vector_store %arg6[%c0_27, %c0_28], %43 {strides = array<i32>} : memref<128x128xf32, #tpu.memory_space<vmem>>, vector<128x128xf32>,
    } else {
    }
    return
  }
  func.func @transform_0(%arg0: i32, %arg1: i32) -> (i32, i32) {
    %c0_i32 = arith.constant 0 : i32
    %c0_i32_0 = arith.constant 0 : i32
    return %arg0, %c0_i32 : i32, i32
  }
  func.func @transform_1(%arg0: i32, %arg1: i32) -> (i32, i32) {
    %c0_i32 = arith.constant 0 : i32
    %c0_i32_0 = arith.constant 0 : i32
    return %arg1, %c0_i32 : i32, i32
  }
  func.func @transform_2(%arg0: i32, %arg1: i32) -> (i32, i32) {
    %c0_i32 = arith.constant 0 : i32
    %c0_i32_0 = arith.constant 0 : i32
    return %arg0, %c0_i32 : i32, i32
  }
  func.func @transform_3(%arg0: i32, %arg1: i32) -> (i32, i32) {
    %c0_i32 = arith.constant 0 : i32
    %c0_i32_0 = arith.constant 0 : i32
    return %c0_i32, %arg1 : i32, i32
  }
  func.func @transform_4(%arg0: i32, %arg1: i32) -> (i32, i32) {
    %c0_i32 = arith.constant 0 : i32
    %c0_i32_0 = arith.constant 0 : i32
    return %arg0, %c0_i32 : i32, i32
  }
}

</mosaic_0001>

<llo_original>
// kernel: cc_loss.1
$region0: #{cc_loss.1}
  #allocation0 [shape = 'u32[]', space=smem, size = 0x4, offset = 0x4, fixed_abs, tag = 'smem constant byte address 0x4 - core index']
  #allocation1 [shape = 'u32[144,128]{1,0:T(1,128)}', space=vmem, size = 0x12000, scoped, tag = 'internal scratch']
  #allocation2 [shape = 'f32[128,1]{1,0:T(8,128)}', space=vmem, size = 0x10000, scoped, tag = 'scratch operand']
  #allocation3 [shape = 'f32[128,1]{1,0:T(8,128)}', space=vmem, size = 0x10000, scoped, tag = 'scratch operand']
  #allocation4 [shape = 'f32[128,1]{1,0:T(8,128)}', space=vmem, size = 0x10000, scoped, tag = 'scratch operand']
  #allocation5 [shape = 'f32[128,1]{1,0:T(8,128)}', space=vmem, size = 0x10000, scoped, tag = 'scratch operand']
  %s0 = inlined_call_operand.hbm [shape: f32[128,128], index: 0, kind: input, shape index: {}, may-alias: {0,1}]
  %s1 = inlined_call_operand.hbm [shape: f32[128,128], index: 1, kind: input, shape index: {}, may-alias: {0,1}]
  %s2 = inlined_call_operand.hbm [shape: s32[128,1], index: 2, kind: input, shape index: {}]
  %s3 = inlined_call_operand.hbm [shape: s32[1,128], index: 3, kind: input, shape index: {}]
  %s4 = inlined_call_operand.hbm [shape: f32[128,128], index: 4, kind: output, shape index: {}]
  %s5 = sld [smem:[#allocation0]]
  $region58: #{cc_loss.1} parent=0
    _
  %s7 = ssub.s32 1, %s5
  %s8 = scalar_select 0, %s7, %s5
  $region1: #{cc_loss.1} parent=0
    #allocation6 [shape = 'u8[65536]{0}', space=vmem, size = 0x10000, scoped, tag = 'input window, operand 0, single buffered']
    #allocation7 [shape = 's32[1]{0}', space=sflag, size = 0x4, scoped, tag = 'scoped memory for cc_loss.1']
    #allocation8 [shape = 's32[1]{0}', space=sflag, size = 0x4, scoped, tag = 'scoped memory for cc_loss.1']
    #allocation9 [shape = 'u8[65536]{0}', space=vmem, size = 0x10000, scoped, tag = 'input window, operand 1, single buffered']
    #allocation10 [shape = 's32[1]{0}', space=sflag, size = 0x4, scoped, tag = 'scoped memory for cc_loss.1']
    #allocation11 [shape = 'u8[65536]{0}', space=vmem, size = 0x10000, scoped, tag = 'input window, operand 2, single buffered']
    #allocation12 [shape = 'u8[512]{0}', space=vmem, size = 0x400, scoped, tag = 'input window, operand 3, single buffered']
    #allocation13 [shape = 's32[1]{0}', space=sflag, size = 0x4, scoped, tag = 'scoped memory for cc_loss.1']
    #allocation14 [shape = 'u8[65536]{0}', space=vmem, size = 0x10000, scoped, tag = 'output window, operand 0, single buffered']
    %9 = vsyncpa [#allocation7], 0
    %10 = vsyncpa [#allocation10], 0
    %11 = vsyncpa [#allocation13], 0
    %12 = vsyncpa [#allocation8], 0
    // Predicated region
    $region2: #{cc_loss.1} parent=1 // pred_check
      _
    $region3: #{cc_loss.1} parent=1 // pred_check_branch
      %14 = sbr.rel (0) target = $region5
    $region4: #{cc_loss.1} parent=1 // pred_region
      %s16 = ssub.s32 2048, 2048
      %17 = vsyncadd [#allocation7], %s16
      %s18 = sshll.u32 [#allocation6], 4
      %s19 = int_to_ptr.vmem [resolvable:$true] %s18
      %24 = dma.hbm_to_vmem [thread:$0]  %s0, 2048, %s19, [#allocation7], 128, 128, 8
    $region5: #{cc_loss.1} parent=1 // pred_fallthru
      _
    // Predicated region
    $region6: #{cc_loss.1} parent=1 // pred_check
      _
    $region7: #{cc_loss.1} parent=1 // pred_check_branch
      %26 = sbr.rel (0) target = $region9
    $region8: #{cc_loss.1} parent=1 // pred_region
      %s28 = ssub.s32 2048, 2048
      %29 = vsyncadd [#allocation10], %s28
      %s30 = sshll.u32 [#allocation9], 4
      %s31 = int_to_ptr.vmem [resolvable:$true] %s30
      %36 = dma.hbm_to_vmem [thread:$0]  %s1, 2048, %s31, [#allocation10], 128, 128, 8
    $region9: #{cc_loss.1} parent=1 // pred_fallthru
      _
    // Predicated region
    $region10: #{cc_loss.1} parent=1 // pred_check
      _
    $region11: #{cc_loss.1} parent=1 // pred_check_branch
      %38 = sbr.rel (0) target = $region13
    $region12: #{cc_loss.1} parent=1 // pred_region
      %s40 = ssub.s32 2048, 2048
      %41 = vsyncadd [#allocation10], %s40
      %s42 = sshll.u32 [#allocation11], 4
      %s43 = int_to_ptr.vmem [resolvable:$true] %s42
      %48 = dma.hbm_to_vmem [thread:$0]  %s2, 2048, %s43, [#allocation10], 128, 128, 8
    $region13: #{cc_loss.1} parent=1 // pred_fallthru
      _
    // Predicated region
    $region14: #{cc_loss.1} parent=1 // pred_check
      _
    $region15: #{cc_loss.1} parent=1 // pred_check_branch
      %50 = sbr.rel (0) target = $region17
    $region16: #{cc_loss.1} parent=1 // pred_region
      %s52 = ssub.s32 16, 16
      %53 = vsyncadd [#allocation13], %s52
      %s55 = sshll.u32 [#allocation12], 4
      %s56 = int_to_ptr.vmem [resolvable:$true] %s55
      %58 = dma.hbm_to_vmem [thread:$0]  %s3, 16, %s56, [#allocation13]
    $region17: #{cc_loss.1} parent=1 // pred_fallthru
      _
    // Predicated region
    $region18: #{cc_loss.1} parent=1 // pred_check
      _
    $region19: #{cc_loss.1} parent=1 // pred_check_branch
      %60 = sbr.rel (0) target = $region21
    $region20: #{cc_loss.1} parent=1 // pred_region
      %61 = dma.done [#allocation7], 2048
    $region21: #{cc_loss.1} parent=1 // pred_fallthru
      _
    // Predicated region
    $region22: #{cc_loss.1} parent=1 // pred_check
      _
    $region23: #{cc_loss.1} parent=1 // pred_check_branch
      %63 = sbr.rel (0) target = $region25
    $region24: #{cc_loss.1} parent=1 // pred_region
      %64 = dma.done [#allocation10], 2048
    $region25: #{cc_loss.1} parent=1 // pred_fallthru
      _
    // Predicated region
    $region26: #{cc_loss.1} parent=1 // pred_check
      _
    $region27: #{cc_loss.1} parent=1 // pred_check_branch
      %66 = sbr.rel (0) target = $region29
    $region28: #{cc_loss.1} parent=1 // pred_region
      %67 = dma.done [#allocation10], 2048
    $region29: #{cc_loss.1} parent=1 // pred_fallthru
      _
    // Predicated region
    $region30: #{cc_loss.1} parent=1 // pred_check
      _
    $region31: #{cc_loss.1} parent=1 // pred_check_branch
      %69 = sbr.rel (0) target = $region33
    $region32: #{cc_loss.1} parent=1 // pred_region
      %70 = dma.done [#allocation13], 16
    $region33: #{cc_loss.1} parent=1 // pred_fallthru
      _
    %p71 = scmp.eq.s32.totalorder 0, 0
    // Predicated region
    $region34: #{cc_loss.1} parent=1 // pred_check
      %p72 = pneg %p71
    $region35: #{cc_loss.1} parent=1 // pred_check_branch
      %74 = sbr.rel (%p72) target = $region37
    $region36: #{cc_loss.1} parent=1 // pred_region
      %vm75 = vcmask 7168
      %76 = vst.msk [vmem:[#allocation2] sm:$0xff] %vm75, -inf
      %77 = vst.msk [vmem:[#allocation2 + $0x8] sm:$0xff] %vm75, -inf
      %78 = vst.msk [vmem:[#allocation2 + $0x10] sm:$0xff] %vm75, -inf
      %79 = vst.msk [vmem:[#allocation2 + $0x18] sm:$0xff] %vm75, -inf
      %80 = vst.msk [vmem:[#allocation2 + $0x20] sm:$0xff] %vm75, -inf
      %81 = vst.msk [vmem:[#allocation2 + $0x28] sm:$0xff] %vm75, -inf
      %82 = vst.msk [vmem:[#allocation2 + $0x30] sm:$0xff] %vm75, -inf
      %83 = vst.msk [vmem:[#allocation2 + $0x38] sm:$0xff] %vm75, -inf
      %84 = vst.msk [vmem:[#allocation2 + $0x40] sm:$0xff] %vm75, -inf
      %85 = vst.msk [vmem:[#allocation2 + $0x48] sm:$0xff] %vm75, -inf
      %86 = vst.msk [vmem:[#allocation2 + $0x50] sm:$0xff] %vm75, -inf
      %87 = vst.msk [vmem:[#allocation2 + $0x58] sm:$0xff] %vm75, -inf
      %88 = vst.msk [vmem:[#allocation2 + $0x60] sm:$0xff] %vm75, -inf
      %89 = vst.msk [vmem:[#allocation2 + $0x68] sm:$0xff] %vm75, -inf
      %90 = vst.msk [vmem:[#allocation2 + $0x70] sm:$0xff] %vm75, -inf
      %91 = vst.msk [vmem:[#allocation2 + $0x78] sm:$0xff] %vm75, -inf
      %92 = vst.msk [vmem:[#allocation3] sm:$0xff] %vm75, 0.0
      %93 = vst.msk [vmem:[#allocation3 + $0x8] sm:$0xff] %vm75, 0.0
      %94 = vst.msk [vmem:[#allocation3 + $0x10] sm:$0xff] %vm75, 0.0
      %95 = vst.msk [vmem:[#allocation3 + $0x18] sm:$0xff] %vm75, 0.0
      %96 = vst.msk [vmem:[#allocation3 + $0x20] sm:$0xff] %vm75, 0.0
      %97 = vst.msk [vmem:[#allocation3 + $0x28] sm:$0xff] %vm75, 0.0
      %98 = vst.msk [vmem:[#allocation3 + $0x30] sm:$0xff] %vm75, 0.0
      %99 = vst.msk [vmem:[#allocation3 + $0x38] sm:$0xff] %vm75, 0.0
      %100 = vst.msk [vmem:[#allocation3 + $0x40] sm:$0xff] %vm75, 0.0
      %101 = vst.msk [vmem:[#allocation3 + $0x48] sm:$0xff] %vm75, 0.0
      %102 = vst.msk [vmem:[#allocation3 + $0x50] sm:$0xff] %vm75, 0.0
      %103 = vst.msk [vmem:[#allocation3 + $0x58] sm:$0xff] %vm75, 0.0
      %104 = vst.msk [vmem:[#allocation3 + $0x60] sm:$0xff] %vm75, 0.0
      %105 = vst.msk [vmem:[#allocation3 + $0x68] sm:$0xff] %vm75, 0.0
      %106 = vst.msk [vmem:[#allocation3 + $0x70] sm:$0xff] %vm75, 0.0
      %107 = vst.msk [vmem:[#allocation3 + $0x78] sm:$0xff] %vm75, 0.0
      %108 = vst.msk [vmem:[#allocation4] sm:$0xff] %vm75, 0.0
      %109 = vst.msk [vmem:[#allocation4 + $0x8] sm:$0xff] %vm75, 0.0
      %110 = vst.msk [vmem:[#allocation4 + $0x10] sm:$0xff] %vm75, 0.0
      %111 = vst.msk [vmem:[#allocation4 + $0x18] sm:$0xff] %vm75, 0.0
      %112 = vst.msk [vmem:[#allocation4 + $0x20] sm:$0xff] %vm75, 0.0
      %113 = vst.msk [vmem:[#allocation4 + $0x28] sm:$0xff] %vm75, 0.0
      %114 = vst.msk [vmem:[#allocation4 + $0x30] sm:$0xff] %vm75, 0.0
      %115 = vst.msk [vmem:[#allocation4 + $0x38] sm:$0xff] %vm75, 0.0
      %116 = vst.msk [vmem:[#allocation4 + $0x40] sm:$0xff] %vm75, 0.0
      %117 = vst.msk [vmem:[#allocation4 + $0x48] sm:$0xff] %vm75, 0.0
      %118 = vst.msk [vmem:[#allocation4 + $0x50] sm:$0xff] %vm75, 0.0
      %119 = vst.msk [vmem:[#allocation4 + $0x58] sm:$0xff] %vm75, 0.0
      %120 = vst.msk [vmem:[#allocation4 + $0x60] sm:$0xff] %vm75, 0.0
      %121 = vst.msk [vmem:[#allocation4 + $0x68] sm:$0xff] %vm75, 0.0
      %122 = vst.msk [vmem:[#allocation4 + $0x70] sm:$0xff] %vm75, 0.0
      %123 = vst.msk [vmem:[#allocation4 + $0x78] sm:$0xff] %vm75, 0.0
      %124 = vst.msk [vmem:[#allocation5] sm:$0xff] %vm75, 0.0
      %125 = vst.msk [vmem:[#allocation5 + $0x8] sm:$0xff] %vm75, 0.0
      %126 = vst.msk [vmem:[#allocation5 + $0x10] sm:$0xff] %vm75, 0.0
      %127 = vst.msk [vmem:[#allocation5 + $0x18] sm:$0xff] %vm75, 0.0
      %128 = vst.msk [vmem:[#allocation5 + $0x20] sm:$0xff] %vm75, 0.0
      %129 = vst.msk [vmem:[#allocation5 + $0x28] sm:$0xff] %vm75, 0.0
      %130 = vst.msk [vmem:[#allocation5 + $0x30] sm:$0xff] %vm75, 0.0
      %131 = vst.msk [vmem:[#allocation5 + $0x38] sm:$0xff] %vm75, 0.0
      %132 = vst.msk [vmem:[#allocation5 + $0x40] sm:$0xff] %vm75, 0.0
      %133 = vst.msk [vmem:[#allocation5 + $0x48] sm:$0xff] %vm75, 0.0
      %134 = vst.msk [vmem:[#allocation5 + $0x50] sm:$0xff] %vm75, 0.0
      %135 = vst.msk [vmem:[#allocation5 + $0x58] sm:$0xff] %vm75, 0.0
      %136 = vst.msk [vmem:[#allocation5 + $0x60] sm:$0xff] %vm75, 0.0
      %137 = vst.msk [vmem:[#allocation5 + $0x68] sm:$0xff] %vm75, 0.0
      %138 = vst.msk [vmem:[#allocation5 + $0x70] sm:$0xff] %vm75, 0.0
      %139 = vst.msk [vmem:[#allocation5 + $0x78] sm:$0xff] %vm75, 0.0
    $region37: #{cc_loss.1} parent=1 // pred_fallthru
      _
    %v140 = vld [vmem:[#allocation6] sm:$0xff]
    %v141 = vld [vmem:[#allocation6 + $0x8] sm:$0xff]
    %v142 = vld [vmem:[#allocation6 + $0x10] sm:$0xff]
    %v143 = vld [vmem:[#allocation6 + $0x18] sm:$0xff]
    %v144 = vld [vmem:[#allocation6 + $0x20] sm:$0xff]
    %v145 = vld [vmem:[#allocation6 + $0x28] sm:$0xff]
    %v146 = vld [vmem:[#allocation6 + $0x30] sm:$0xff]
    %v147 = vld [vmem:[#allocation6 + $0x38] sm:$0xff]
    %v148 = vld [vmem:[#allocation6 + $0x40] sm:$0xff]
    %v149 = vld [vmem:[#allocation6 + $0x48] sm:$0xff]
    %v150 = vld [vmem:[#allocation6 + $0x50] sm:$0xff]
    %v151 = vld [vmem:[#allocation6 + $0x58] sm:$0xff]
    %v152 = vld [vmem:[#allocation6 + $0x60] sm:$0xff]
    %v153 = vld [vmem:[#allocation6 + $0x68] sm:$0xff]
    %v154 = vld [vmem:[#allocation6 + $0x70] sm:$0xff]
    %v155 = vld [vmem:[#allocation6 + $0x78] sm:$0xff]
    %v156 = vld [vmem:[#allocation9] sm:$0xff]
    %v157 = vld [vmem:[#allocation9 + $0x8] sm:$0xff]
    %v158 = vld [vmem:[#allocation9 + $0x10] sm:$0xff]
    %v159 = vld [vmem:[#allocation9 + $0x18] sm:$0xff]
    %v160 = vld [vmem:[#allocation9 + $0x20] sm:$0xff]
    %v161 = vld [vmem:[#allocation9 + $0x28] sm:$0xff]
    %v162 = vld [vmem:[#allocation9 + $0x30] sm:$0xff]
    %v163 = vld [vmem:[#allocation9 + $0x38] sm:$0xff]
    %v164 = vld [vmem:[#allocation9 + $0x40] sm:$0xff]
    %v165 = vld [vmem:[#allocation9 + $0x48] sm:$0xff]
    %v166 = vld [vmem:[#allocation9 + $0x50] sm:$0xff]
    %v167 = vld [vmem:[#allocation9 + $0x58] sm:$0xff]
    %v168 = vld [vmem:[#allocation9 + $0x60] sm:$0xff]
    %v169 = vld [vmem:[#allocation9 + $0x68] sm:$0xff]
    %v170 = vld [vmem:[#allocation9 + $0x70] sm:$0xff]
    %v171 = vld [vmem:[#allocation9 + $0x78] sm:$0xff]
    %172 = vmatprep.subr.mxu0 0.0
    %173 = vmatpush1.xpose.msra.mxu0 %v156
    %174 = vmatprep.subr.mxu0 0.0
    %175 = vmatpush1.xpose.msra.mxu0 %v157
    %176 = vmatprep.subr.mxu0 0.0
    %177 = vmatpush1.xpose.msra.mxu0 %v158
    %178 = vmatprep.subr.mxu0 0.0
    %179 = vmatpush1.xpose.msra.mxu0 %v159
    %180 = vmatprep.subr.mxu0 0.0
    %181 = vmatpush1.xpose.msra.mxu0 %v160
    %182 = vmatprep.subr.mxu0 0.0
    %183 = vmatpush1.xpose.msra.mxu0 %v161
    %184 = vmatprep.subr.mxu0 0.0
    %185 = vmatpush1.xpose.msra.mxu0 %v162
    %186 = vmatprep.subr.mxu0 0.0
    %187 = vmatpush1.xpose.msra.mxu0 %v163
    %188 = vmatprep.subr.mxu0 0.0
    %189 = vmatpush1.xpose.msra.mxu0 %v164
    %190 = vmatprep.subr.mxu0 0.0
    %191 = vmatpush1.xpose.msra.mxu0 %v165
    %192 = vmatprep.subr.mxu0 0.0
    %193 = vmatpush1.xpose.msra.mxu0 %v166
    %194 = vmatprep.subr.mxu0 0.0
    %195 = vmatpush1.xpose.msra.mxu0 %v167
    %196 = vmatprep.subr.mxu0 0.0
    %197 = vmatpush1.xpose.msra.mxu0 %v168
    %198 = vmatprep.subr.mxu0 0.0
    %199 = vmatpush1.xpose.msra.mxu0 %v169
    %200 = vmatprep.subr.mxu0 0.0
    %201 = vmatpush1.xpose.msra.mxu0 %v170
    %202 = vmatprep.subr.mxu0 0.0
    %203 = vmatpush1.xpose.msra.mxu0 %v171
    %204 = vmatprep.subr.mxu0 0.0
    %205 = vmatpush1.xpose.msra.mxu0 0.0
    %206 = vmatprep.subr.mxu0 0.0
    %207 = vmatpush1.xpose.msra.mxu0 0.0
    %208 = vmatprep.subr.mxu0 0.0
    %209 = vmatpush1.xpose.msra.mxu0 0.0
    %210 = vmatprep.subr.mxu0 0.0
    %211 = vmatpush1.xpose.msra.mxu0 0.0
    %212 = vmatprep.subr.mxu0 0.0
    %213 = vmatpush1.xpose.msra.mxu0 0.0
    %214 = vmatprep.subr.mxu0 0.0
    %215 = vmatpush1.xpose.msra.mxu0 0.0
    %216 = vmatprep.subr.mxu0 0.0
    %217 = vmatpush1.xpose.msra.mxu0 0.0
    %218 = vmatprep.subr.mxu0 0.0
    %219 = vmatpush1.xpose.msra.mxu0 0.0
    %220 = vmatprep.subr.mxu0 0.0
    %221 = vmatpush1.xpose.msra.mxu0 0.0
    %222 = vmatprep.subr.mxu0 0.0
    %223 = vmatpush1.xpose.msra.mxu0 0.0
    %224 = vmatprep.subr.mxu0 0.0
    %225 = vmatpush1.xpose.msra.mxu0 0.0
    %226 = vmatprep.subr.mxu0 0.0
    %227 = vmatpush1.xpose.msra.mxu0 0.0
    %228 = vmatprep.subr.mxu0 0.0
    %229 = vmatpush1.xpose.msra.mxu0 0.0
    %230 = vmatprep.subr.mxu0 0.0
    %231 = vmatpush1.xpose.msra.mxu0 0.0
    %232 = vmatprep.subr.mxu0 0.0
    %233 = vmatpush1.xpose.msra.mxu0 0.0
    %234 = vmatprep.subr.mxu0 0.0
    %235 = vmatpush1.xpose.msra.mxu0 0.0
    %236 = vmatprep.mubr.f32.mxu0 0.0
    %237 = vmatmul.mubr.f32.gmra.mrb[0].mxu0 %v140
    %v238 = vpop.f32.mrb[0].mxu0
    %v239 = vadd.f32 0.0, %v238
    %v240 = vpop.f32.mrb[0].mxu0
    %241 = vmatprep.mubr.f32.mxu0 0.0
    %242 = vmatmul.mubr.f32.gmra.mrb[0].mxu0 %v141
    %v243 = vpop.f32.mrb[0].mxu0
    %v244 = vadd.f32 0.0, %v243
    %v245 = vpop.f32.mrb[0].mxu0
    %246 = vmatprep.mubr.f32.mxu0 0.0
    %247 = vmatmul.mubr.f32.gmra.mrb[0].mxu0 %v142
    %v248 = vpop.f32.mrb[0].mxu0
    %v249 = vadd.f32 0.0, %v248
    %v250 = vpop.f32.mrb[0].mxu0
    %251 = vmatprep.mubr.f32.mxu0 0.0
    %252 = vmatmul.mubr.f32.gmra.mrb[0].mxu0 %v143
    %v253 = vpop.f32.mrb[0].mxu0
    %v254 = vadd.f32 0.0, %v253
    %v255 = vpop.f32.mrb[0].mxu0
    %256 = vmatprep.mubr.f32.mxu0 0.0
    %257 = vmatmul.mubr.f32.gmra.mrb[0].mxu0 %v144
    %v258 = vpop.f32.mrb[0].mxu0
    %v259 = vadd.f32 0.0, %v258
    %v260 = vpop.f32.mrb[0].mxu0
    %261 = vmatprep.mubr.f32.mxu0 0.0
    %262 = vmatmul.mubr.f32.gmra.mrb[0].mxu0 %v145
    %v263 = vpop.f32.mrb[0].mxu0
    %v264 = vadd.f32 0.0, %v263
    %v265 = vpop.f32.mrb[0].mxu0
    %266 = vmatprep.mubr.f32.mxu0 0.0
    %267 = vmatmul.mubr.f32.gmra.mrb[0].mxu0 %v146
    %v268 = vpop.f32.mrb[0].mxu0
    %v269 = vadd.f32 0.0, %v268
    %v270 = vpop.f32.mrb[0].mxu0
    %271 = vmatprep.mubr.f32.mxu0 0.0
    %272 = vmatmul.mubr.f32.gmra.mrb[0].mxu0 %v147
    %v273 = vpop.f32.mrb[0].mxu0
    %v274 = vadd.f32 0.0, %v273
    %v275 = vpop.f32.mrb[0].mxu0
    %276 = vmatprep.mubr.f32.mxu0 0.0
    %277 = vmatmul.mubr.f32.gmra.mrb[0].mxu0 %v148
    %v278 = vpop.f32.mrb[0].mxu0
    %v279 = vadd.f32 0.0, %v278
    %v280 = vpop.f32.mrb[0].mxu0
    %281 = vmatprep.mubr.f32.mxu0 0.0
    %282 = vmatmul.mubr.f32.gmra.mrb[0].mxu0 %v149
    %v283 = vpop.f32.mrb[0].mxu0
    %v284 = vadd.f32 0.0, %v283
    %v285 = vpop.f32.mrb[0].mxu0
    %286 = vmatprep.mubr.f32.mxu0 0.0
    %287 = vmatmul.mubr.f32.gmra.mrb[0].mxu0 %v150
    %v288 = vpop.f32.mrb[0].mxu0
    %v289 = vadd.f32 0.0, %v288
    %v290 = vpop.f32.mrb[0].mxu0
    %291 = vmatprep.mubr.f32.mxu0 0.0
    %292 = vmatmul.mubr.f32.gmra.mrb[0].mxu0 %v151
    %v293 = vpop.f32.mrb[0].mxu0
    %v294 = vadd.f32 0.0, %v293
    %v295 = vpop.f32.mrb[0].mxu0
    %296 = vmatprep.mubr.f32.mxu0 0.0
    %297 = vmatmul.mubr.f32.gmra.mrb[0].mxu0 %v152
    %v298 = vpop.f32.mrb[0].mxu0
    %v299 = vadd.f32 0.0, %v298
    %v300 = vpop.f32.mrb[0].mxu0
    %301 = vmatprep.mubr.f32.mxu0 0.0
    %302 = vmatmul.mubr.f32.gmra.mrb[0].mxu0 %v153
    %v303 = vpop.f32.mrb[0].mxu0
    %v304 = vadd.f32 0.0, %v303
    %v305 = vpop.f32.mrb[0].mxu0
    %306 = vmatprep.mubr.f32.mxu0 0.0
    %307 = vmatmul.mubr.f32.gmra.mrb[0].mxu0 %v154
    %v308 = vpop.f32.mrb[0].mxu0
    %v309 = vadd.f32 0.0, %v308
    %v310 = vpop.f32.mrb[0].mxu0
    %311 = vmatprep.mubr.f32.mxu0 0.0
    %312 = vmatmul.mubr.f32.gmra.mrb[0].mxu0 %v155
    %v313 = vpop.f32.mrb[0].mxu0
    %v314 = vadd.f32 0.0, %v313
    %v315 = vpop.f32.mrb[0].mxu0
    %316 = vdwg.mxu0
    %317 = vmax.xlane.f32.xlu0 %v239
    %v318 = vpop.xlane.xlu0 %317
    %319 = vmax.xlane.f32.xlu0 %v244
    %v320 = vpop.xlane.xlu0 %319
    %321 = vmax.xlane.f32.xlu0 %v249
    %v322 = vpop.xlane.xlu0 %321
    %323 = vmax.xlane.f32.xlu0 %v254
    %v324 = vpop.xlane.xlu0 %323
    %325 = vmax.xlane.f32.xlu0 %v259
    %v326 = vpop.xlane.xlu0 %325
    %327 = vmax.xlane.f32.xlu0 %v264
    %v328 = vpop.xlane.xlu0 %327
    %329 = vmax.xlane.f32.xlu0 %v269
    %v330 = vpop.xlane.xlu0 %329
    %331 = vmax.xlane.f32.xlu0 %v274
    %v332 = vpop.xlane.xlu0 %331
    %333 = vmax.xlane.f32.xlu0 %v279
    %v334 = vpop.xlane.xlu0 %333
    %335 = vmax.xlane.f32.xlu0 %v284
    %v336 = vpop.xlane.xlu0 %335
    %337 = vmax.xlane.f32.xlu0 %v289
    %v338 = vpop.xlane.xlu0 %337
    %339 = vmax.xlane.f32.xlu0 %v294
    %v340 = vpop.xlane.xlu0 %339
    %341 = vmax.xlane.f32.xlu0 %v299
    %v342 = vpop.xlane.xlu0 %341
    %343 = vmax.xlane.f32.xlu0 %v304
    %v344 = vpop.xlane.xlu0 %343
    %345 = vmax.xlane.f32.xlu0 %v309
    %v346 = vpop.xlane.xlu0 %345
    %347 = vmax.xlane.f32.xlu0 %v314
    %v348 = vpop.xlane.xlu0 %347
    %v349 = vld [vmem:[#allocation2] sm:$0xff]
    %v350 = vld [vmem:[#allocation2 + $0x8] sm:$0xff]
    %v351 = vld [vmem:[#allocation2 + $0x10] sm:$0xff]
    %v352 = vld [vmem:[#allocation2 + $0x18] sm:$0xff]
    %v353 = vld [vmem:[#allocation2 + $0x20] sm:$0xff]
    %v354 = vld [vmem:[#allocation2 + $0x28] sm:$0xff]
    %v355 = vld [vmem:[#allocation2 + $0x30] sm:$0xff]
    %v356 = vld [vmem:[#allocation2 + $0x38] sm:$0xff]
    %v357 = vld [vmem:[#allocation2 + $0x40] sm:$0xff]
    %v358 = vld [vmem:[#allocation2 + $0x48] sm:$0xff]
    %v359 = vld [vmem:[#allocation2 + $0x50] sm:$0xff]
    %v360 = vld [vmem:[#allocation2 + $0x58] sm:$0xff]
    %v361 = vld [vmem:[#allocation2 + $0x60] sm:$0xff]
    %v362 = vld [vmem:[#allocation2 + $0x68] sm:$0xff]
    %v363 = vld [vmem:[#allocation2 + $0x70] sm:$0xff]
    %v364 = vld [vmem:[#allocation2 + $0x78] sm:$0xff]
    %v365 = vmax.f32 %v349, %v318
    %v366 = vmax.f32 %v350, %v320
    %v367 = vmax.f32 %v351, %v322
    %v368 = vmax.f32 %v352, %v324
    %v369 = vmax.f32 %v353, %v326
    %v370 = vmax.f32 %v354, %v328
    %v371 = vmax.f32 %v355, %v330
    %v372 = vmax.f32 %v356, %v332
    %v373 = vmax.f32 %v357, %v334
    %v374 = vmax.f32 %v358, %v336
    %v375 = vmax.f32 %v359, %v338
    %v376 = vmax.f32 %v360, %v340
    %v377 = vmax.f32 %v361, %v342
    %v378 = vmax.f32 %v362, %v344
    %v379 = vmax.f32 %v363, %v346
    %v380 = vmax.f32 %v364, %v348
    %v381 = vsub.f32 %v349, %v365
    %v382 = vsub.f32 %v350, %v366
    %v383 = vsub.f32 %v351, %v367
    %v384 = vsub.f32 %v352, %v368
    %v385 = vsub.f32 %v353, %v369
    %v386 = vsub.f32 %v354, %v370
    %v387 = vsub.f32 %v355, %v371
    %v388 = vsub.f32 %v356, %v372
    %v389 = vsub.f32 %v357, %v373
    %v390 = vsub.f32 %v358, %v374
    %v391 = vsub.f32 %v359, %v375
    %v392 = vsub.f32 %v360, %v376
    %v393 = vsub.f32 %v361, %v377
    %v394 = vsub.f32 %v362, %v378
    %v395 = vsub.f32 %v363, %v379
    %v396 = vsub.f32 %v364, %v380
    %v397 = vmul.f32 %v381, 1.442695
    %v398 = vpow.pop %v397
    %v399 = vmul.f32 %v382, 1.442695
    %v400 = vpow.pop %v399
    %v401 = vmul.f32 %v383, 1.442695
    %v402 = vpow.pop %v401
    %v403 = vmul.f32 %v384, 1.442695
    %v404 = vpow.pop %v403
    %v405 = vmul.f32 %v385, 1.442695
    %v406 = vpow.pop %v405
    %v407 = vmul.f32 %v386, 1.442695
    %v408 = vpow.pop %v407
    %v409 = vmul.f32 %v387, 1.442695
    %v410 = vpow.pop %v409
    %v411 = vmul.f32 %v388, 1.442695
    %v412 = vpow.pop %v411
    %v413 = vmul.f32 %v389, 1.442695
    %v414 = vpow.pop %v413
    %v415 = vmul.f32 %v390, 1.442695
    %v416 = vpow.pop %v415
    %v417 = vmul.f32 %v391, 1.442695
    %v418 = vpow.pop %v417
    %v419 = vmul.f32 %v392, 1.442695
    %v420 = vpow.pop %v419
    %v421 = vmul.f32 %v393, 1.442695
    %v422 = vpow.pop %v421
    %v423 = vmul.f32 %v394, 1.442695
    %v424 = vpow.pop %v423
    %v425 = vmul.f32 %v395, 1.442695
    %v426 = vpow.pop %v425
    %v427 = vmul.f32 %v396, 1.442695
    %v428 = vpow.pop %v427
    %v429 = vld [vmem:[#allocation11] sm:$0xff]
    %v430 = vld [vmem:[#allocation11 + $0x8] sm:$0xff]
    %v431 = vld [vmem:[#allocation11 + $0x10] sm:$0xff]
    %v432 = vld [vmem:[#allocation11 + $0x18] sm:$0xff]
    %v433 = vld [vmem:[#allocation11 + $0x20] sm:$0xff]
    %v434 = vld [vmem:[#allocation11 + $0x28] sm:$0xff]
    %v435 = vld [vmem:[#allocation11 + $0x30] sm:$0xff]
    %v436 = vld [vmem:[#allocation11 + $0x38] sm:$0xff]
    %v437 = vld [vmem:[#allocation11 + $0x40] sm:$0xff]
    %v438 = vld [vmem:[#allocation11 + $0x48] sm:$0xff]
    %v439 = vld [vmem:[#allocation11 + $0x50] sm:$0xff]
    %v440 = vld [vmem:[#allocation11 + $0x58] sm:$0xff]
    %v441 = vld [vmem:[#allocation11 + $0x60] sm:$0xff]
    %v442 = vld [vmem:[#allocation11 + $0x68] sm:$0xff]
    %v443 = vld [vmem:[#allocation11 + $0x70] sm:$0xff]
    %v444 = vld [vmem:[#allocation11 + $0x78] sm:$0xff]
    %v445 = vld [vmem:[#allocation12] sm:$0x1]
    %vm446 = vcmp.ne.s32.totalorder %v445, 92
    %447 = vset.pattern.permute.xlu0 0
    %448 = vperm.xlu0 %447, %v429
    %v449 = vpop.permute.xlu0 %448
    %450 = vset.pattern.permute.xlu0 0
    %451 = vperm.xlu0 %450, %v430
    %v452 = vpop.permute.xlu0 %451
    %453 = vset.pattern.permute.xlu0 0
    %454 = vperm.xlu0 %453, %v431
    %v455 = vpop.permute.xlu0 %454
    %456 = vset.pattern.permute.xlu0 0
    %457 = vperm.xlu0 %456, %v432
    %v458 = vpop.permute.xlu0 %457
    %459 = vset.pattern.permute.xlu0 0
    %460 = vperm.xlu0 %459, %v433
    %v461 = vpop.permute.xlu0 %460
    %462 = vset.pattern.permute.xlu0 0
    %463 = vperm.xlu0 %462, %v434
    %v464 = vpop.permute.xlu0 %463
    %465 = vset.pattern.permute.xlu0 0
    %466 = vperm.xlu0 %465, %v435
    %v467 = vpop.permute.xlu0 %466
    %468 = vset.pattern.permute.xlu0 0
    %469 = vperm.xlu0 %468, %v436
    %v470 = vpop.permute.xlu0 %469
    %471 = vset.pattern.permute.xlu0 0
    %472 = vperm.xlu0 %471, %v437
    %v473 = vpop.permute.xlu0 %472
    %474 = vset.pattern.permute.xlu0 0
    %475 = vperm.xlu0 %474, %v438
    %v476 = vpop.permute.xlu0 %475
    %477 = vset.pattern.permute.xlu0 0
    %478 = vperm.xlu0 %477, %v439
    %v479 = vpop.permute.xlu0 %478
    %480 = vset.pattern.permute.xlu0 0
    %481 = vperm.xlu0 %480, %v440
    %v482 = vpop.permute.xlu0 %481
    %483 = vset.pattern.permute.xlu0 0
    %484 = vperm.xlu0 %483, %v441
    %v485 = vpop.permute.xlu0 %484
    %486 = vset.pattern.permute.xlu0 0
    %487 = vperm.xlu0 %486, %v442
    %v488 = vpop.permute.xlu0 %487
    %489 = vset.pattern.permute.xlu0 0
    %490 = vperm.xlu0 %489, %v443
    %v491 = vpop.permute.xlu0 %490
    %492 = vset.pattern.permute.xlu0 0
    %493 = vperm.xlu0 %492, %v444
    %v494 = vpop.permute.xlu0 %493
    %v495 = vlaneseq
    %v496 = vshrl.u32 %v495, 7
    %v497 = vsub.s32 0, %v496
    %v498 = vrot.slane %v445, %v497
    %vm499 = vcmp.eq.s32.totalorder %v449, %v498
    %vm500 = vcmp.eq.s32.totalorder %v452, %v498
    %vm501 = vcmp.eq.s32.totalorder %v455, %v498
    %vm502 = vcmp.eq.s32.totalorder %v458, %v498
    %vm503 = vcmp.eq.s32.totalorder %v461, %v498
    %vm504 = vcmp.eq.s32.totalorder %v464, %v498
    %vm505 = vcmp.eq.s32.totalorder %v467, %v498
    %vm506 = vcmp.eq.s32.totalorder %v470, %v498
    %vm507 = vcmp.eq.s32.totalorder %v473, %v498
    %vm508 = vcmp.eq.s32.totalorder %v476, %v498
    %vm509 = vcmp.eq.s32.totalorder %v479, %v498
    %vm510 = vcmp.eq.s32.totalorder %v482, %v498
    %vm511 = vcmp.eq.s32.totalorder %v485, %v498
    %vm512 = vcmp.eq.s32.totalorder %v488, %v498
    %vm513 = vcmp.eq.s32.totalorder %v491, %v498
    %vm514 = vcmp.eq.s32.totalorder %v494, %v498
    %p515 = scmp.ne.s32.totalorder 0, 0
    // Predicated region
    $region38: #{cc_loss.1} parent=1 // pred_check
      %p516 = pneg %p515
    $region39: #{cc_loss.1} parent=1 // pred_check_branch
      %518 = sbr.rel (%p516) target = $region41
    $region40: #{cc_loss.1} parent=1 // pred_region
      %520 = vset.pattern.permute.xlu0 0
      %521 = vperm.xlu0 %520, %v365
      %v522 = vpop.permute.xlu0 %521
      %525 = vset.pattern.permute.xlu0 0
      %526 = vperm.xlu0 %525, %v366
      %v527 = vpop.permute.xlu0 %526
      %530 = vset.pattern.permute.xlu0 0
      %531 = vperm.xlu0 %530, %v367
      %v532 = vpop.permute.xlu0 %531
      %535 = vset.pattern.permute.xlu0 0
      %536 = vperm.xlu0 %535, %v368
      %v537 = vpop.permute.xlu0 %536
      %540 = vset.pattern.permute.xlu0 0
      %541 = vperm.xlu0 %540, %v369
      %v542 = vpop.permute.xlu0 %541
      %545 = vset.pattern.permute.xlu0 0
      %546 = vperm.xlu0 %545, %v370
      %v547 = vpop.permute.xlu0 %546
      %550 = vset.pattern.permute.xlu0 0
      %551 = vperm.xlu0 %550, %v371
      %v552 = vpop.permute.xlu0 %551
      %555 = vset.pattern.permute.xlu0 0
      %556 = vperm.xlu0 %555, %v372
      %v557 = vpop.permute.xlu0 %556
      %560 = vset.pattern.permute.xlu0 0
      %561 = vperm.xlu0 %560, %v373
      %v562 = vpop.permute.xlu0 %561
      %565 = vset.pattern.permute.xlu0 0
      %566 = vperm.xlu0 %565, %v374
      %v567 = vpop.permute.xlu0 %566
      %570 = vset.pattern.permute.xlu0 0
      %571 = vperm.xlu0 %570, %v375
      %v572 = vpop.permute.xlu0 %571
      %575 = vset.pattern.permute.xlu0 0
      %576 = vperm.xlu0 %575, %v376
      %v577 = vpop.permute.xlu0 %576
      %580 = vset.pattern.permute.xlu0 0
      %581 = vperm.xlu0 %580, %v377
      %v582 = vpop.permute.xlu0 %581
      %585 = vset.pattern.permute.xlu0 0
      %586 = vperm.xlu0 %585, %v378
      %v587 = vpop.permute.xlu0 %586
      %590 = vset.pattern.permute.xlu0 0
      %591 = vperm.xlu0 %590, %v379
      %v592 = vpop.permute.xlu0 %591
      %595 = vset.pattern.permute.xlu0 0
      %596 = vperm.xlu0 %595, %v380
      %v597 = vpop.permute.xlu0 %596
      %v599 = vsub.f32 %v239, %v522
      %v600 = vsub.f32 %v244, %v527
      %v601 = vsub.f32 %v249, %v532
      %v602 = vsub.f32 %v254, %v537
      %v603 = vsub.f32 %v259, %v542
      %v604 = vsub.f32 %v264, %v547
      %v605 = vsub.f32 %v269, %v552
      %v606 = vsub.f32 %v274, %v557
      %v607 = vsub.f32 %v279, %v562
      %v608 = vsub.f32 %v284, %v567
      %v609 = vsub.f32 %v289, %v572
      %v610 = vsub.f32 %v294, %v577
      %v611 = vsub.f32 %v299, %v582
      %v612 = vsub.f32 %v304, %v587
      %v613 = vsub.f32 %v309, %v592
      %v614 = vsub.f32 %v314, %v597
      %v615 = vmul.f32 %v599, 1.442695
      %v616 = vpow.pop %v615
      %v617 = vmul.f32 %v600, 1.442695
      %v618 = vpow.pop %v617
      %v619 = vmul.f32 %v601, 1.442695
      %v620 = vpow.pop %v619
      %v621 = vmul.f32 %v602, 1.442695
      %v622 = vpow.pop %v621
      %v623 = vmul.f32 %v603, 1.442695
      %v624 = vpow.pop %v623
      %v625 = vmul.f32 %v604, 1.442695
      %v626 = vpow.pop %v625
      %v627 = vmul.f32 %v605, 1.442695
      %v628 = vpow.pop %v627
      %v629 = vmul.f32 %v606, 1.442695
      %v630 = vpow.pop %v629
      %v631 = vmul.f32 %v607, 1.442695
      %v632 = vpow.pop %v631
      %v633 = vmul.f32 %v608, 1.442695
      %v634 = vpow.pop %v633
      %v635 = vmul.f32 %v609, 1.442695
      %v636 = vpow.pop %v635
      %v637 = vmul.f32 %v610, 1.442695
      %v638 = vpow.pop %v637
      %v639 = vmul.f32 %v611, 1.442695
      %v640 = vpow.pop %v639
      %v641 = vmul.f32 %v612, 1.442695
      %v642 = vpow.pop %v641
      %v643 = vmul.f32 %v613, 1.442695
      %v644 = vpow.pop %v643
      %v645 = vmul.f32 %v614, 1.442695
      %v646 = vpow.pop %v645
      %v647 = vsel %vm446, 1, 0
      %v648 = vlaneseq
      %v649 = vshrl.u32 %v648, 7
      %v650 = vsub.s32 0, %v649
      %v651 = vrot.slane %v647, %v650
      %vm652 = vcmp.eq.s32.totalorder %v651, 1
      %v653 = vsel %vm652, %v616, 0.0
      %v654 = vsel %vm652, %v618, 0.0
      %v655 = vsel %vm652, %v620, 0.0
      %v656 = vsel %vm652, %v622, 0.0
      %v657 = vsel %vm652, %v624, 0.0
      %v658 = vsel %vm652, %v626, 0.0
      %v659 = vsel %vm652, %v628, 0.0
      %v660 = vsel %vm652, %v630, 0.0
      %v661 = vsel %vm652, %v632, 0.0
      %v662 = vsel %vm652, %v634, 0.0
      %v663 = vsel %vm652, %v636, 0.0
      %v664 = vsel %vm652, %v638, 0.0
      %v665 = vsel %vm652, %v640, 0.0
      %v666 = vsel %vm652, %v642, 0.0
      %v667 = vsel %vm652, %v644, 0.0
      %v668 = vsel %vm652, %v646, 0.0
      %vm669 = vmand %vm652, %vm499
      %vm670 = vmand %vm652, %vm500
      %vm671 = vmand %vm652, %vm501
      %vm672 = vmand %vm652, %vm502
      %vm673 = vmand %vm652, %vm503
      %vm674 = vmand %vm652, %vm504
      %vm675 = vmand %vm652, %vm505
      %vm676 = vmand %vm652, %vm506
      %vm677 = vmand %vm652, %vm507
      %vm678 = vmand %vm652, %vm508
      %vm679 = vmand %vm652, %vm509
      %vm680 = vmand %vm652, %vm510
      %vm681 = vmand %vm652, %vm511
      %vm682 = vmand %vm652, %vm512
      %vm683 = vmand %vm652, %vm513
      %vm684 = vmand %vm652, %vm514
      %v685 = vsel %vm669, 1.0, 0.0
      %v686 = vsel %vm670, 1.0, 0.0
      %v687 = vsel %vm671, 1.0, 0.0
      %v688 = vsel %vm672, 1.0, 0.0
      %v689 = vsel %vm673, 1.0, 0.0
      %v690 = vsel %vm674, 1.0, 0.0
      %v691 = vsel %vm675, 1.0, 0.0
      %v692 = vsel %vm676, 1.0, 0.0
      %v693 = vsel %vm677, 1.0, 0.0
      %v694 = vsel %vm678, 1.0, 0.0
      %v695 = vsel %vm679, 1.0, 0.0
      %v696 = vsel %vm680, 1.0, 0.0
      %v697 = vsel %vm681, 1.0, 0.0
      %v698 = vsel %vm682, 1.0, 0.0
      %v699 = vsel %vm683, 1.0, 0.0
      %v700 = vsel %vm684, 1.0, 0.0
      %v701 = vld [vmem:[#allocation3] sm:$0xff]
      %v702 = vld [vmem:[#allocation3 + $0x8] sm:$0xff]
      %v703 = vld [vmem:[#allocation3 + $0x10] sm:$0xff]
      %v704 = vld [vmem:[#allocation3 + $0x18] sm:$0xff]
      %v705 = vld [vmem:[#allocation3 + $0x20] sm:$0xff]
      %v706 = vld [vmem:[#allocation3 + $0x28] sm:$0xff]
      %v707 = vld [vmem:[#allocation3 + $0x30] sm:$0xff]
      %v708 = vld [vmem:[#allocation3 + $0x38] sm:$0xff]
      %v709 = vld [vmem:[#allocation3 + $0x40] sm:$0xff]
      %v710 = vld [vmem:[#allocation3 + $0x48] sm:$0xff]
      %v711 = vld [vmem:[#allocation3 + $0x50] sm:$0xff]
      %v712 = vld [vmem:[#allocation3 + $0x58] sm:$0xff]
      %v713 = vld [vmem:[#allocation3 + $0x60] sm:$0xff]
      %v714 = vld [vmem:[#allocation3 + $0x68] sm:$0xff]
      %v715 = vld [vmem:[#allocation3 + $0x70] sm:$0xff]
      %v716 = vld [vmem:[#allocation3 + $0x78] sm:$0xff]
      %v717 = vmul.f32 %v398, %v701
      %v718 = vmul.f32 %v400, %v702
      %v719 = vmul.f32 %v402, %v703
      %v720 = vmul.f32 %v404, %v704
      %v721 = vmul.f32 %v406, %v705
      %v722 = vmul.f32 %v408, %v706
      %v723 = vmul.f32 %v410, %v707
      %v724 = vmul.f32 %v412, %v708
      %v725 = vmul.f32 %v414, %v709
      %v726 = vmul.f32 %v416, %v710
      %v727 = vmul.f32 %v418, %v711
      %v728 = vmul.f32 %v420, %v712
      %v729 = vmul.f32 %v422, %v713
      %v730 = vmul.f32 %v424, %v714
      %v731 = vmul.f32 %v426, %v715
      %v732 = vmul.f32 %v428, %v716
      %733 = vadd.xlane.f32.xlu0 %v653
      %v734 = vpop.xlane.xlu0 %733
      %735 = vadd.xlane.f32.xlu0 %v654
      %v736 = vpop.xlane.xlu0 %735
      %737 = vadd.xlane.f32.xlu0 %v655
      %v738 = vpop.xlane.xlu0 %737
      %739 = vadd.xlane.f32.xlu0 %v656
      %v740 = vpop.xlane.xlu0 %739
      %741 = vadd.xlane.f32.xlu0 %v657
      %v742 = vpop.xlane.xlu0 %741
      %743 = vadd.xlane.f32.xlu0 %v658
      %v744 = vpop.xlane.xlu0 %743
      %745 = vadd.xlane.f32.xlu0 %v659
      %v746 = vpop.xlane.xlu0 %745
      %747 = vadd.xlane.f32.xlu0 %v660
      %v748 = vpop.xlane.xlu0 %747
      %749 = vadd.xlane.f32.xlu0 %v661
      %v750 = vpop.xlane.xlu0 %749
      %751 = vadd.xlane.f32.xlu0 %v662
      %v752 = vpop.xlane.xlu0 %751
      %753 = vadd.xlane.f32.xlu0 %v663
      %v754 = vpop.xlane.xlu0 %753
      %755 = vadd.xlane.f32.xlu0 %v664
      %v756 = vpop.xlane.xlu0 %755
      %757 = vadd.xlane.f32.xlu0 %v665
      %v758 = vpop.xlane.xlu0 %757
      %759 = vadd.xlane.f32.xlu0 %v666
      %v760 = vpop.xlane.xlu0 %759
      %761 = vadd.xlane.f32.xlu0 %v667
      %v762 = vpop.xlane.xlu0 %761
      %763 = vadd.xlane.f32.xlu0 %v668
      %v764 = vpop.xlane.xlu0 %763
      %v765 = vadd.f32 %v717, %v734
      %v766 = vadd.f32 %v718, %v736
      %v767 = vadd.f32 %v719, %v738
      %v768 = vadd.f32 %v720, %v740
      %v769 = vadd.f32 %v721, %v742
      %v770 = vadd.f32 %v722, %v744
      %v771 = vadd.f32 %v723, %v746
      %v772 = vadd.f32 %v724, %v748
      %v773 = vadd.f32 %v725, %v750
      %v774 = vadd.f32 %v726, %v752
      %v775 = vadd.f32 %v727, %v754
      %v776 = vadd.f32 %v728, %v756
      %v777 = vadd.f32 %v729, %v758
      %v778 = vadd.f32 %v730, %v760
      %v779 = vadd.f32 %v731, %v762
      %v780 = vadd.f32 %v732, %v764
      %vm781 = vcmask 7168
      %782 = vst.msk [vmem:[#allocation3] sm:$0xff] %vm781, %v765
      %783 = vst.msk [vmem:[#allocation3 + $0x8] sm:$0xff] %vm781, %v766
      %784 = vst.msk [vmem:[#allocation3 + $0x10] sm:$0xff] %vm781, %v767
      %785 = vst.msk [vmem:[#allocation3 + $0x18] sm:$0xff] %vm781, %v768
      %786 = vst.msk [vmem:[#allocation3 + $0x20] sm:$0xff] %vm781, %v769
      %787 = vst.msk [vmem:[#allocation3 + $0x28] sm:$0xff] %vm781, %v770
      %788 = vst.msk [vmem:[#allocation3 + $0x30] sm:$0xff] %vm781, %v771
      %789 = vst.msk [vmem:[#allocation3 + $0x38] sm:$0xff] %vm781, %v772
      %790 = vst.msk [vmem:[#allocation3 + $0x40] sm:$0xff] %vm781, %v773
      %791 = vst.msk [vmem:[#allocation3 + $0x48] sm:$0xff] %vm781, %v774
      %792 = vst.msk [vmem:[#allocation3 + $0x50] sm:$0xff] %vm781, %v775
      %793 = vst.msk [vmem:[#allocation3 + $0x58] sm:$0xff] %vm781, %v776
      %794 = vst.msk [vmem:[#allocation3 + $0x60] sm:$0xff] %vm781, %v777
      %795 = vst.msk [vmem:[#allocation3 + $0x68] sm:$0xff] %vm781, %v778
      %796 = vst.msk [vmem:[#allocation3 + $0x70] sm:$0xff] %vm781, %v779
      %797 = vst.msk [vmem:[#allocation3 + $0x78] sm:$0xff] %vm781, %v780
      %v798 = vld [vmem:[#allocation4] sm:$0xff]
      %v799 = vld [vmem:[#allocation4 + $0x8] sm:$0xff]
      %v800 = vld [vmem:[#allocation4 + $0x10] sm:$0xff]
      %v801 = vld [vmem:[#allocation4 + $0x18] sm:$0xff]
      %v802 = vld [vmem:[#allocation4 + $0x20] sm:$0xff]
      %v803 = vld [vmem:[#allocation4 + $0x28] sm:$0xff]
      %v804 = vld [vmem:[#allocation4 + $0x30] sm:$0xff]
      %v805 = vld [vmem:[#allocation4 + $0x38] sm:$0xff]
      %v806 = vld [vmem:[#allocation4 + $0x40] sm:$0xff]
      %v807 = vld [vmem:[#allocation4 + $0x48] sm:$0xff]
      %v808 = vld [vmem:[#allocation4 + $0x50] sm:$0xff]
      %v809 = vld [vmem:[#allocation4 + $0x58] sm:$0xff]
      %v810 = vld [vmem:[#allocation4 + $0x60] sm:$0xff]
      %v811 = vld [vmem:[#allocation4 + $0x68] sm:$0xff]
      %v812 = vld [vmem:[#allocation4 + $0x70] sm:$0xff]
      %v813 = vld [vmem:[#allocation4 + $0x78] sm:$0xff]
      %v814 = vmul.f32 %v685, %v239
      %v815 = vmul.f32 %v686, %v244
      %v816 = vmul.f32 %v687, %v249
      %v817 = vmul.f32 %v688, %v254
      %v818 = vmul.f32 %v689, %v259
      %v819 = vmul.f32 %v690, %v264
      %v820 = vmul.f32 %v691, %v269
      %v821 = vmul.f32 %v692, %v274
      %v822 = vmul.f32 %v693, %v279
      %v823 = vmul.f32 %v694, %v284
      %v824 = vmul.f32 %v695, %v289
      %v825 = vmul.f32 %v696, %v294
      %v826 = vmul.f32 %v697, %v299
      %v827 = vmul.f32 %v698, %v304
      %v828 = vmul.f32 %v699, %v309
      %v829 = vmul.f32 %v700, %v314
      %830 = vadd.xlane.f32.xlu0 %v814
      %v831 = vpop.xlane.xlu0 %830
      %832 = vadd.xlane.f32.xlu0 %v815
      %v833 = vpop.xlane.xlu0 %832
      %834 = vadd.xlane.f32.xlu0 %v816
      %v835 = vpop.xlane.xlu0 %834
      %836 = vadd.xlane.f32.xlu0 %v817
      %v837 = vpop.xlane.xlu0 %836
      %838 = vadd.xlane.f32.xlu0 %v818
      %v839 = vpop.xlane.xlu0 %838
      %840 = vadd.xlane.f32.xlu0 %v819
      %v841 = vpop.xlane.xlu0 %840
      %842 = vadd.xlane.f32.xlu0 %v820
      %v843 = vpop.xlane.xlu0 %842
      %844 = vadd.xlane.f32.xlu0 %v821
      %v845 = vpop.xlane.xlu0 %844
      %846 = vadd.xlane.f32.xlu0 %v822
      %v847 = vpop.xlane.xlu0 %846
      %848 = vadd.xlane.f32.xlu0 %v823
      %v849 = vpop.xlane.xlu0 %848
      %850 = vadd.xlane.f32.xlu0 %v824
      %v851 = vpop.xlane.xlu0 %850
      %852 = vadd.xlane.f32.xlu0 %v825
      %v853 = vpop.xlane.xlu0 %852
      %854 = vadd.xlane.f32.xlu0 %v826
      %v855 = vpop.xlane.xlu0 %854
      %856 = vadd.xlane.f32.xlu0 %v827
      %v857 = vpop.xlane.xlu0 %856
      %858 = vadd.xlane.f32.xlu0 %v828
      %v859 = vpop.xlane.xlu0 %858
      %860 = vadd.xlane.f32.xlu0 %v829
      %v861 = vpop.xlane.xlu0 %860
      %v862 = vadd.f32 %v798, %v831
      %v863 = vadd.f32 %v799, %v833
      %v864 = vadd.f32 %v800, %v835
      %v865 = vadd.f32 %v801, %v837
      %v866 = vadd.f32 %v802, %v839
      %v867 = vadd.f32 %v803, %v841
      %v868 = vadd.f32 %v804, %v843
      %v869 = vadd.f32 %v805, %v845
      %v870 = vadd.f32 %v806, %v847
      %v871 = vadd.f32 %v807, %v849
      %v872 = vadd.f32 %v808, %v851
      %v873 = vadd.f32 %v809, %v853
      %v874 = vadd.f32 %v810, %v855
      %v875 = vadd.f32 %v811, %v857
      %v876 = vadd.f32 %v812, %v859
      %v877 = vadd.f32 %v813, %v861
      %878 = vst.msk [vmem:[#allocation4] sm:$0xff] %vm781, %v862
      %879 = vst.msk [vmem:[#allocation4 + $0x8] sm:$0xff] %vm781, %v863
      %880 = vst.msk [vmem:[#allocation4 + $0x10] sm:$0xff] %vm781, %v864
      %881 = vst.msk [vmem:[#allocation4 + $0x18] sm:$0xff] %vm781, %v865
      %882 = vst.msk [vmem:[#allocation4 + $0x20] sm:$0xff] %vm781, %v866
      %883 = vst.msk [vmem:[#allocation4 + $0x28] sm:$0xff] %vm781, %v867
      %884 = vst.msk [vmem:[#allocation4 + $0x30] sm:$0xff] %vm781, %v868
      %885 = vst.msk [vmem:[#allocation4 + $0x38] sm:$0xff] %vm781, %v869
      %886 = vst.msk [vmem:[#allocation4 + $0x40] sm:$0xff] %vm781, %v870
      %887 = vst.msk [vmem:[#allocation4 + $0x48] sm:$0xff] %vm781, %v871
      %888 = vst.msk [vmem:[#allocation4 + $0x50] sm:$0xff] %vm781, %v872
      %889 = vst.msk [vmem:[#allocation4 + $0x58] sm:$0xff] %vm781, %v873
      %890 = vst.msk [vmem:[#allocation4 + $0x60] sm:$0xff] %vm781, %v874
      %891 = vst.msk [vmem:[#allocation4 + $0x68] sm:$0xff] %vm781, %v875
      %892 = vst.msk [vmem:[#allocation4 + $0x70] sm:$0xff] %vm781, %v876
      %893 = vst.msk [vmem:[#allocation4 + $0x78] sm:$0xff] %vm781, %v877
      %v894 = vld [vmem:[#allocation5] sm:$0xff]
      %v895 = vld [vmem:[#allocation5 + $0x8] sm:$0xff]
      %v896 = vld [vmem:[#allocation5 + $0x10] sm:$0xff]
      %v897 = vld [vmem:[#allocation5 + $0x18] sm:$0xff]
      %v898 = vld [vmem:[#allocation5 + $0x20] sm:$0xff]
      %v899 = vld [vmem:[#allocation5 + $0x28] sm:$0xff]
      %v900 = vld [vmem:[#allocation5 + $0x30] sm:$0xff]
      %v901 = vld [vmem:[#allocation5 + $0x38] sm:$0xff]
      %v902 = vld [vmem:[#allocation5 + $0x40] sm:$0xff]
      %v903 = vld [vmem:[#allocation5 + $0x48] sm:$0xff]
      %v904 = vld [vmem:[#allocation5 + $0x50] sm:$0xff]
      %v905 = vld [vmem:[#allocation5 + $0x58] sm:$0xff]
      %v906 = vld [vmem:[#allocation5 + $0x60] sm:$0xff]
      %v907 = vld [vmem:[#allocation5 + $0x68] sm:$0xff]
      %v908 = vld [vmem:[#allocation5 + $0x70] sm:$0xff]
      %v909 = vld [vmem:[#allocation5 + $0x78] sm:$0xff]
      %910 = vadd.xlane.f32.xlu0 %v685
      %v911 = vpop.xlane.xlu0 %910
      %912 = vadd.xlane.f32.xlu0 %v686
      %v913 = vpop.xlane.xlu0 %912
      %914 = vadd.xlane.f32.xlu0 %v687
      %v915 = vpop.xlane.xlu0 %914
      %916 = vadd.xlane.f32.xlu0 %v688
      %v917 = vpop.xlane.xlu0 %916
      %918 = vadd.xlane.f32.xlu0 %v689
      %v919 = vpop.xlane.xlu0 %918
      %920 = vadd.xlane.f32.xlu0 %v690
      %v921 = vpop.xlane.xlu0 %920
      %922 = vadd.xlane.f32.xlu0 %v691
      %v923 = vpop.xlane.xlu0 %922
      %924 = vadd.xlane.f32.xlu0 %v692
      %v925 = vpop.xlane.xlu0 %924
      %926 = vadd.xlane.f32.xlu0 %v693
      %v927 = vpop.xlane.xlu0 %926
      %928 = vadd.xlane.f32.xlu0 %v694
      %v929 = vpop.xlane.xlu0 %928
      %930 = vadd.xlane.f32.xlu0 %v695
      %v931 = vpop.xlane.xlu0 %930
      %932 = vadd.xlane.f32.xlu0 %v696
      %v933 = vpop.xlane.xlu0 %932
      %934 = vadd.xlane.f32.xlu0 %v697
      %v935 = vpop.xlane.xlu0 %934
      %936 = vadd.xlane.f32.xlu0 %v698
      %v937 = vpop.xlane.xlu0 %936
      %938 = vadd.xlane.f32.xlu0 %v699
      %v939 = vpop.xlane.xlu0 %938
      %940 = vadd.xlane.f32.xlu0 %v700
      %v941 = vpop.xlane.xlu0 %940
      %v942 = vadd.f32 %v894, %v911
      %v943 = vadd.f32 %v895, %v913
      %v944 = vadd.f32 %v896, %v915
      %v945 = vadd.f32 %v897, %v917
      %v946 = vadd.f32 %v898, %v919
      %v947 = vadd.f32 %v899, %v921
      %v948 = vadd.f32 %v900, %v923
      %v949 = vadd.f32 %v901, %v925
      %v950 = vadd.f32 %v902, %v927
      %v951 = vadd.f32 %v903, %v929
      %v952 = vadd.f32 %v904, %v931
      %v953 = vadd.f32 %v905, %v933
      %v954 = vadd.f32 %v906, %v935
      %v955 = vadd.f32 %v907, %v937
      %v956 = vadd.f32 %v908, %v939
      %v957 = vadd.f32 %v909, %v941
      %958 = vst.msk [vmem:[#allocation5] sm:$0xff] %vm781, %v942
      %959 = vst.msk [vmem:[#allocation5 + $0x8] sm:$0xff] %vm781, %v943
      %960 = vst.msk [vmem:[#allocation5 + $0x10] sm:$0xff] %vm781, %v944
      %961 = vst.msk [vmem:[#allocation5 + $0x18] sm:$0xff] %vm781, %v945
      %962 = vst.msk [vmem:[#allocation5 + $0x20] sm:$0xff] %vm781, %v946
      %963 = vst.msk [vmem:[#allocation5 + $0x28] sm:$0xff] %vm781, %v947
      %964 = vst.msk [vmem:[#allocation5 + $0x30] sm:$0xff] %vm781, %v948
      %965 = vst.msk [vmem:[#allocation5 + $0x38] sm:$0xff] %vm781, %v949
      %966 = vst.msk [vmem:[#allocation5 + $0x40] sm:$0xff] %vm781, %v950
      %967 = vst.msk [vmem:[#allocation5 + $0x48] sm:$0xff] %vm781, %v951
      %968 = vst.msk [vmem:[#allocation5 + $0x50] sm:$0xff] %vm781, %v952
      %969 = vst.msk [vmem:[#allocation5 + $0x58] sm:$0xff] %vm781, %v953
      %970 = vst.msk [vmem:[#allocation5 + $0x60] sm:$0xff] %vm781, %v954
      %971 = vst.msk [vmem:[#allocation5 + $0x68] sm:$0xff] %vm781, %v955
      %972 = vst.msk [vmem:[#allocation5 + $0x70] sm:$0xff] %vm781, %v956
      %973 = vst.msk [vmem:[#allocation5 + $0x78] sm:$0xff] %vm781, %v957
    $region41: #{cc_loss.1} parent=1 // pred_fallthru
      _
    %p974 = scmp.eq.s32.totalorder 0, 0
    // Predicated region
    $region42: #{cc_loss.1} parent=1 // pred_check
      %p975 = pneg %p974
    $region43: #{cc_loss.1} parent=1 // pred_check_branch
      %977 = sbr.rel (%p975) target = $region45
    $region44: #{cc_loss.1} parent=1 // pred_region
      %v978 = vlaneseq
      %v979 = vshrl.u32 %v978, 7
      %v980 = vadd.s32 %v979, 8
      %v981 = vadd.s32 %v979, 16
      %v982 = vadd.s32 %v979, 24
      %v983 = vadd.s32 %v979, 32
      %v984 = vadd.s32 %v979, 40
      %v985 = vadd.s32 %v979, 48
      %v986 = vadd.s32 %v979, 56
      %v987 = vadd.s32 %v979, 64
      %v988 = vadd.s32 %v979, 72
      %v989 = vadd.s32 %v979, 80
      %v990 = vadd.s32 %v979, 88
      %v991 = vadd.s32 %v979, 96
      %v992 = vadd.s32 %v979, 104
      %v993 = vadd.s32 %v979, 112
      %v994 = vadd.s32 %v979, 120
      %v995 = vlaneseq
      %v996 = vand.u32 %v995, 127
      %vm997 = vcmp.ne.s32.totalorder %v979, %v996
      %vm998 = vcmp.ne.s32.totalorder %v980, %v996
      %vm999 = vcmp.ne.s32.totalorder %v981, %v996
      %vm1000 = vcmp.ne.s32.totalorder %v982, %v996
      %vm1001 = vcmp.ne.s32.totalorder %v983, %v996
      %vm1002 = vcmp.ne.s32.totalorder %v984, %v996
      %vm1003 = vcmp.ne.s32.totalorder %v985, %v996
      %vm1004 = vcmp.ne.s32.totalorder %v986, %v996
      %vm1005 = vcmp.ne.s32.totalorder %v987, %v996
      %vm1006 = vcmp.ne.s32.totalorder %v988, %v996
      %vm1007 = vcmp.ne.s32.totalorder %v989, %v996
      %vm1008 = vcmp.ne.s32.totalorder %v990, %v996
      %vm1009 = vcmp.ne.s32.totalorder %v991, %v996
      %vm1010 = vcmp.ne.s32.totalorder %v992, %v996
      %vm1011 = vcmp.ne.s32.totalorder %v993, %v996
      %vm1012 = vcmp.ne.s32.totalorder %v994, %v996
      %v1013 = vsel %vm446, 1, 0
      %v1014 = vlaneseq
      %v1015 = vshrl.u32 %v1014, 7
      %v1016 = vsub.s32 0, %v1015
      %v1017 = vrot.slane %v1013, %v1016
      %vm1018 = vcmp.eq.s32.totalorder %v1017, 1
      %vm1019 = vmand %vm997, %vm1018
      %vm1020 = vmand %vm998, %vm1018
      %vm1021 = vmand %vm999, %vm1018
      %vm1022 = vmand %vm1000, %vm1018
      %vm1023 = vmand %vm1001, %vm1018
      %vm1024 = vmand %vm1002, %vm1018
      %vm1025 = vmand %vm1003, %vm1018
      %vm1026 = vmand %vm1004, %vm1018
      %vm1027 = vmand %vm1005, %vm1018
      %vm1028 = vmand %vm1006, %vm1018
      %vm1029 = vmand %vm1007, %vm1018
      %vm1030 = vmand %vm1008, %vm1018
      %vm1031 = vmand %vm1009, %vm1018
      %vm1032 = vmand %vm1010, %vm1018
      %vm1033 = vmand %vm1011, %vm1018
      %vm1034 = vmand %vm1012, %vm1018
      %1036 = vset.pattern.permute.xlu0 0
      %1037 = vperm.xlu0 %1036, %v365
      %v1038 = vpop.permute.xlu0 %1037
      %1041 = vset.pattern.permute.xlu0 0
      %1042 = vperm.xlu0 %1041, %v366
      %v1043 = vpop.permute.xlu0 %1042
      %1046 = vset.pattern.permute.xlu0 0
      %1047 = vperm.xlu0 %1046, %v367
      %v1048 = vpop.permute.xlu0 %1047
      %1051 = vset.pattern.permute.xlu0 0
      %1052 = vperm.xlu0 %1051, %v368
      %v1053 = vpop.permute.xlu0 %1052
      %1056 = vset.pattern.permute.xlu0 0
      %1057 = vperm.xlu0 %1056, %v369
      %v1058 = vpop.permute.xlu0 %1057
      %1061 = vset.pattern.permute.xlu0 0
      %1062 = vperm.xlu0 %1061, %v370
      %v1063 = vpop.permute.xlu0 %1062
      %1066 = vset.pattern.permute.xlu0 0
      %1067 = vperm.xlu0 %1066, %v371
      %v1068 = vpop.permute.xlu0 %1067
      %1071 = vset.pattern.permute.xlu0 0
      %1072 = vperm.xlu0 %1071, %v372
      %v1073 = vpop.permute.xlu0 %1072
      %1076 = vset.pattern.permute.xlu0 0
      %1077 = vperm.xlu0 %1076, %v373
      %v1078 = vpop.permute.xlu0 %1077
      %1081 = vset.pattern.permute.xlu0 0
      %1082 = vperm.xlu0 %1081, %v374
      %v1083 = vpop.permute.xlu0 %1082
      %1086 = vset.pattern.permute.xlu0 0
      %1087 = vperm.xlu0 %1086, %v375
      %v1088 = vpop.permute.xlu0 %1087
      %1091 = vset.pattern.permute.xlu0 0
      %1092 = vperm.xlu0 %1091, %v376
      %v1093 = vpop.permute.xlu0 %1092
      %1096 = vset.pattern.permute.xlu0 0
      %1097 = vperm.xlu0 %1096, %v377
      %v1098 = vpop.permute.xlu0 %1097
      %1101 = vset.pattern.permute.xlu0 0
      %1102 = vperm.xlu0 %1101, %v378
      %v1103 = vpop.permute.xlu0 %1102
      %1106 = vset.pattern.permute.xlu0 0
      %1107 = vperm.xlu0 %1106, %v379
      %v1108 = vpop.permute.xlu0 %1107
      %1111 = vset.pattern.permute.xlu0 0
      %1112 = vperm.xlu0 %1111, %v380
      %v1113 = vpop.permute.xlu0 %1112
      %v1115 = vsub.f32 %v239, %v1038
      %v1116 = vsub.f32 %v244, %v1043
      %v1117 = vsub.f32 %v249, %v1048
      %v1118 = vsub.f32 %v254, %v1053
      %v1119 = vsub.f32 %v259, %v1058
      %v1120 = vsub.f32 %v264, %v1063
      %v1121 = vsub.f32 %v269, %v1068
      %v1122 = vsub.f32 %v274, %v1073
      %v1123 = vsub.f32 %v279, %v1078
      %v1124 = vsub.f32 %v284, %v1083
      %v1125 = vsub.f32 %v289, %v1088
      %v1126 = vsub.f32 %v294, %v1093
      %v1127 = vsub.f32 %v299, %v1098
      %v1128 = vsub.f32 %v304, %v1103
      %v1129 = vsub.f32 %v309, %v1108
      %v1130 = vsub.f32 %v314, %v1113
      %v1131 = vmul.f32 %v1115, 1.442695
      %v1132 = vpow.pop %v1131
      %v1133 = vmul.f32 %v1116, 1.442695
      %v1134 = vpow.pop %v1133
      %v1135 = vmul.f32 %v1117, 1.442695
      %v1136 = vpow.pop %v1135
      %v1137 = vmul.f32 %v1118, 1.442695
      %v1138 = vpow.pop %v1137
      %v1139 = vmul.f32 %v1119, 1.442695
      %v1140 = vpow.pop %v1139
      %v1141 = vmul.f32 %v1120, 1.442695
      %v1142 = vpow.pop %v1141
      %v1143 = vmul.f32 %v1121, 1.442695
      %v1144 = vpow.pop %v1143
      %v1145 = vmul.f32 %v1122, 1.442695
      %v1146 = vpow.pop %v1145
      %v1147 = vmul.f32 %v1123, 1.442695
      %v1148 = vpow.pop %v1147
      %v1149 = vmul.f32 %v1124, 1.442695
      %v1150 = vpow.pop %v1149
      %v1151 = vmul.f32 %v1125, 1.442695
      %v1152 = vpow.pop %v1151
      %v1153 = vmul.f32 %v1126, 1.442695
      %v1154 = vpow.pop %v1153
      %v1155 = vmul.f32 %v1127, 1.442695
      %v1156 = vpow.pop %v1155
      %v1157 = vmul.f32 %v1128, 1.442695
      %v1158 = vpow.pop %v1157
      %v1159 = vmul.f32 %v1129, 1.442695
      %v1160 = vpow.pop %v1159
      %v1161 = vmul.f32 %v1130, 1.442695
      %v1162 = vpow.pop %v1161
      %v1163 = vsel %vm1019, %v1132, 0.0
      %v1164 = vsel %vm1020, %v1134, 0.0
      %v1165 = vsel %vm1021, %v1136, 0.0
      %v1166 = vsel %vm1022, %v1138, 0.0
      %v1167 = vsel %vm1023, %v1140, 0.0
      %v1168 = vsel %vm1024, %v1142, 0.0
      %v1169 = vsel %vm1025, %v1144, 0.0
      %v1170 = vsel %vm1026, %v1146, 0.0
      %v1171 = vsel %vm1027, %v1148, 0.0
      %v1172 = vsel %vm1028, %v1150, 0.0
      %v1173 = vsel %vm1029, %v1152, 0.0
      %v1174 = vsel %vm1030, %v1154, 0.0
      %v1175 = vsel %vm1031, %v1156, 0.0
      %v1176 = vsel %vm1032, %v1158, 0.0
      %v1177 = vsel %vm1033, %v1160, 0.0
      %v1178 = vsel %vm1034, %v1162, 0.0
      %vm1179 = vmand %vm1019, %vm499
      %vm1180 = vmand %vm1020, %vm500
      %vm1181 = vmand %vm1021, %vm501
      %vm1182 = vmand %vm1022, %vm502
      %vm1183 = vmand %vm1023, %vm503
      %vm1184 = vmand %vm1024, %vm504
      %vm1185 = vmand %vm1025, %vm505
      %vm1186 = vmand %vm1026, %vm506
      %vm1187 = vmand %vm1027, %vm507
      %vm1188 = vmand %vm1028, %vm508
      %vm1189 = vmand %vm1029, %vm509
      %vm1190 = vmand %vm1030, %vm510
      %vm1191 = vmand %vm1031, %vm511
      %vm1192 = vmand %vm1032, %vm512
      %vm1193 = vmand %vm1033, %vm513
      %vm1194 = vmand %vm1034, %vm514
      %v1195 = vsel %vm1179, 1.0, 0.0
      %v1196 = vsel %vm1180, 1.0, 0.0
      %v1197 = vsel %vm1181, 1.0, 0.0
      %v1198 = vsel %vm1182, 1.0, 0.0
      %v1199 = vsel %vm1183, 1.0, 0.0
      %v1200 = vsel %vm1184, 1.0, 0.0
      %v1201 = vsel %vm1185, 1.0, 0.0
      %v1202 = vsel %vm1186, 1.0, 0.0
      %v1203 = vsel %vm1187, 1.0, 0.0
      %v1204 = vsel %vm1188, 1.0, 0.0
      %v1205 = vsel %vm1189, 1.0, 0.0
      %v1206 = vsel %vm1190, 1.0, 0.0
      %v1207 = vsel %vm1191, 1.0, 0.0
      %v1208 = vsel %vm1192, 1.0, 0.0
      %v1209 = vsel %vm1193, 1.0, 0.0
      %v1210 = vsel %vm1194, 1.0, 0.0
      %v1211 = vld [vmem:[#allocation3] sm:$0xff]
      %v1212 = vld [vmem:[#allocation3 + $0x8] sm:$0xff]
      %v1213 = vld [vmem:[#allocation3 + $0x10] sm:$0xff]
      %v1214 = vld [vmem:[#allocation3 + $0x18] sm:$0xff]
      %v1215 = vld [vmem:[#allocation3 + $0x20] sm:$0xff]
      %v1216 = vld [vmem:[#allocation3 + $0x28] sm:$0xff]
      %v1217 = vld [vmem:[#allocation3 + $0x30] sm:$0xff]
      %v1218 = vld [vmem:[#allocation3 + $0x38] sm:$0xff]
      %v1219 = vld [vmem:[#allocation3 + $0x40] sm:$0xff]
      %v1220 = vld [vmem:[#allocation3 + $0x48] sm:$0xff]
      %v1221 = vld [vmem:[#allocation3 + $0x50] sm:$0xff]
      %v1222 = vld [vmem:[#allocation3 + $0x58] sm:$0xff]
      %v1223 = vld [vmem:[#allocation3 + $0x60] sm:$0xff]
      %v1224 = vld [vmem:[#allocation3 + $0x68] sm:$0xff]
      %v1225 = vld [vmem:[#allocation3 + $0x70] sm:$0xff]
      %v1226 = vld [vmem:[#allocation3 + $0x78] sm:$0xff]
      %v1227 = vmul.f32 %v398, %v1211
      %v1228 = vmul.f32 %v400, %v1212
      %v1229 = vmul.f32 %v402, %v1213
      %v1230 = vmul.f32 %v404, %v1214
      %v1231 = vmul.f32 %v406, %v1215
      %v1232 = vmul.f32 %v408, %v1216
      %v1233 = vmul.f32 %v410, %v1217
      %v1234 = vmul.f32 %v412, %v1218
      %v1235 = vmul.f32 %v414, %v1219
      %v1236 = vmul.f32 %v416, %v1220
      %v1237 = vmul.f32 %v418, %v1221
      %v1238 = vmul.f32 %v420, %v1222
      %v1239 = vmul.f32 %v422, %v1223
      %v1240 = vmul.f32 %v424, %v1224
      %v1241 = vmul.f32 %v426, %v1225
      %v1242 = vmul.f32 %v428, %v1226
      %1243 = vadd.xlane.f32.xlu0 %v1163
      %v1244 = vpop.xlane.xlu0 %1243
      %1245 = vadd.xlane.f32.xlu0 %v1164
      %v1246 = vpop.xlane.xlu0 %1245
      %1247 = vadd.xlane.f32.xlu0 %v1165
      %v1248 = vpop.xlane.xlu0 %1247
      %1249 = vadd.xlane.f32.xlu0 %v1166
      %v1250 = vpop.xlane.xlu0 %1249
      %1251 = vadd.xlane.f32.xlu0 %v1167
      %v1252 = vpop.xlane.xlu0 %1251
      %1253 = vadd.xlane.f32.xlu0 %v1168
      %v1254 = vpop.xlane.xlu0 %1253
      %1255 = vadd.xlane.f32.xlu0 %v1169
      %v1256 = vpop.xlane.xlu0 %1255
      %1257 = vadd.xlane.f32.xlu0 %v1170
      %v1258 = vpop.xlane.xlu0 %1257
      %1259 = vadd.xlane.f32.xlu0 %v1171
      %v1260 = vpop.xlane.xlu0 %1259
      %1261 = vadd.xlane.f32.xlu0 %v1172
      %v1262 = vpop.xlane.xlu0 %1261
      %1263 = vadd.xlane.f32.xlu0 %v1173
      %v1264 = vpop.xlane.xlu0 %1263
      %1265 = vadd.xlane.f32.xlu0 %v1174
      %v1266 = vpop.xlane.xlu0 %1265
      %1267 = vadd.xlane.f32.xlu0 %v1175
      %v1268 = vpop.xlane.xlu0 %1267
      %1269 = vadd.xlane.f32.xlu0 %v1176
      %v1270 = vpop.xlane.xlu0 %1269
      %1271 = vadd.xlane.f32.xlu0 %v1177
      %v1272 = vpop.xlane.xlu0 %1271
      %1273 = vadd.xlane.f32.xlu0 %v1178
      %v1274 = vpop.xlane.xlu0 %1273
      %v1275 = vadd.f32 %v1227, %v1244
      %v1276 = vadd.f32 %v1228, %v1246
      %v1277 = vadd.f32 %v1229, %v1248
      %v1278 = vadd.f32 %v1230, %v1250
      %v1279 = vadd.f32 %v1231, %v1252
      %v1280 = vadd.f32 %v1232, %v1254
      %v1281 = vadd.f32 %v1233, %v1256
      %v1282 = vadd.f32 %v1234, %v1258
      %v1283 = vadd.f32 %v1235, %v1260
      %v1284 = vadd.f32 %v1236, %v1262
      %v1285 = vadd.f32 %v1237, %v1264
      %v1286 = vadd.f32 %v1238, %v1266
      %v1287 = vadd.f32 %v1239, %v1268
      %v1288 = vadd.f32 %v1240, %v1270
      %v1289 = vadd.f32 %v1241, %v1272
      %v1290 = vadd.f32 %v1242, %v1274
      %vm1291 = vcmask 7168
      %1292 = vst.msk [vmem:[#allocation3] sm:$0xff] %vm1291, %v1275
      %1293 = vst.msk [vmem:[#allocation3 + $0x8] sm:$0xff] %vm1291, %v1276
      %1294 = vst.msk [vmem:[#allocation3 + $0x10] sm:$0xff] %vm1291, %v1277
      %1295 = vst.msk [vmem:[#allocation3 + $0x18] sm:$0xff] %vm1291, %v1278
      %1296 = vst.msk [vmem:[#allocation3 + $0x20] sm:$0xff] %vm1291, %v1279
      %1297 = vst.msk [vmem:[#allocation3 + $0x28] sm:$0xff] %vm1291, %v1280
      %1298 = vst.msk [vmem:[#allocation3 + $0x30] sm:$0xff] %vm1291, %v1281
      %1299 = vst.msk [vmem:[#allocation3 + $0x38] sm:$0xff] %vm1291, %v1282
      %1300 = vst.msk [vmem:[#allocation3 + $0x40] sm:$0xff] %vm1291, %v1283
      %1301 = vst.msk [vmem:[#allocation3 + $0x48] sm:$0xff] %vm1291, %v1284
      %1302 = vst.msk [vmem:[#allocation3 + $0x50] sm:$0xff] %vm1291, %v1285
      %1303 = vst.msk [vmem:[#allocation3 + $0x58] sm:$0xff] %vm1291, %v1286
      %1304 = vst.msk [vmem:[#allocation3 + $0x60] sm:$0xff] %vm1291, %v1287
      %1305 = vst.msk [vmem:[#allocation3 + $0x68] sm:$0xff] %vm1291, %v1288
      %1306 = vst.msk [vmem:[#allocation3 + $0x70] sm:$0xff] %vm1291, %v1289
      %1307 = vst.msk [vmem:[#allocation3 + $0x78] sm:$0xff] %vm1291, %v1290
      %v1308 = vld [vmem:[#allocation4] sm:$0xff]
      %v1309 = vld [vmem:[#allocation4 + $0x8] sm:$0xff]
      %v1310 = vld [vmem:[#allocation4 + $0x10] sm:$0xff]
      %v1311 = vld [vmem:[#allocation4 + $0x18] sm:$0xff]
      %v1312 = vld [vmem:[#allocation4 + $0x20] sm:$0xff]
      %v1313 = vld [vmem:[#allocation4 + $0x28] sm:$0xff]
      %v1314 = vld [vmem:[#allocation4 + $0x30] sm:$0xff]
      %v1315 = vld [vmem:[#allocation4 + $0x38] sm:$0xff]
      %v1316 = vld [vmem:[#allocation4 + $0x40] sm:$0xff]
      %v1317 = vld [vmem:[#allocation4 + $0x48] sm:$0xff]
      %v1318 = vld [vmem:[#allocation4 + $0x50] sm:$0xff]
      %v1319 = vld [vmem:[#allocation4 + $0x58] sm:$0xff]
      %v1320 = vld [vmem:[#allocation4 + $0x60] sm:$0xff]
      %v1321 = vld [vmem:[#allocation4 + $0x68] sm:$0xff]
      %v1322 = vld [vmem:[#allocation4 + $0x70] sm:$0xff]
      %v1323 = vld [vmem:[#allocation4 + $0x78] sm:$0xff]
      %v1324 = vmul.f32 %v1195, %v239
      %v1325 = vmul.f32 %v1196, %v244
      %v1326 = vmul.f32 %v1197, %v249
      %v1327 = vmul.f32 %v1198, %v254
      %v1328 = vmul.f32 %v1199, %v259
      %v1329 = vmul.f32 %v1200, %v264
      %v1330 = vmul.f32 %v1201, %v269
      %v1331 = vmul.f32 %v1202, %v274
      %v1332 = vmul.f32 %v1203, %v279
      %v1333 = vmul.f32 %v1204, %v284
      %v1334 = vmul.f32 %v1205, %v289
      %v1335 = vmul.f32 %v1206, %v294
      %v1336 = vmul.f32 %v1207, %v299
      %v1337 = vmul.f32 %v1208, %v304
      %v1338 = vmul.f32 %v1209, %v309
      %v1339 = vmul.f32 %v1210, %v314
      %1340 = vadd.xlane.f32.xlu0 %v1324
      %v1341 = vpop.xlane.xlu0 %1340
      %1342 = vadd.xlane.f32.xlu0 %v1325
      %v1343 = vpop.xlane.xlu0 %1342
      %1344 = vadd.xlane.f32.xlu0 %v1326
      %v1345 = vpop.xlane.xlu0 %1344
      %1346 = vadd.xlane.f32.xlu0 %v1327
      %v1347 = vpop.xlane.xlu0 %1346
      %1348 = vadd.xlane.f32.xlu0 %v1328
      %v1349 = vpop.xlane.xlu0 %1348
      %1350 = vadd.xlane.f32.xlu0 %v1329
      %v1351 = vpop.xlane.xlu0 %1350
      %1352 = vadd.xlane.f32.xlu0 %v1330
      %v1353 = vpop.xlane.xlu0 %1352
      %1354 = vadd.xlane.f32.xlu0 %v1331
      %v1355 = vpop.xlane.xlu0 %1354
      %1356 = vadd.xlane.f32.xlu0 %v1332
      %v1357 = vpop.xlane.xlu0 %1356
      %1358 = vadd.xlane.f32.xlu0 %v1333
      %v1359 = vpop.xlane.xlu0 %1358
      %1360 = vadd.xlane.f32.xlu0 %v1334
      %v1361 = vpop.xlane.xlu0 %1360
      %1362 = vadd.xlane.f32.xlu0 %v1335
      %v1363 = vpop.xlane.xlu0 %1362
      %1364 = vadd.xlane.f32.xlu0 %v1336
      %v1365 = vpop.xlane.xlu0 %1364
      %1366 = vadd.xlane.f32.xlu0 %v1337
      %v1367 = vpop.xlane.xlu0 %1366
      %1368 = vadd.xlane.f32.xlu0 %v1338
      %v1369 = vpop.xlane.xlu0 %1368
      %1370 = vadd.xlane.f32.xlu0 %v1339
      %v1371 = vpop.xlane.xlu0 %1370
      %v1372 = vadd.f32 %v1308, %v1341
      %v1373 = vadd.f32 %v1309, %v1343
      %v1374 = vadd.f32 %v1310, %v1345
      %v1375 = vadd.f32 %v1311, %v1347
      %v1376 = vadd.f32 %v1312, %v1349
      %v1377 = vadd.f32 %v1313, %v1351
      %v1378 = vadd.f32 %v1314, %v1353
      %v1379 = vadd.f32 %v1315, %v1355
      %v1380 = vadd.f32 %v1316, %v1357
      %v1381 = vadd.f32 %v1317, %v1359
      %v1382 = vadd.f32 %v1318, %v1361
      %v1383 = vadd.f32 %v1319, %v1363
      %v1384 = vadd.f32 %v1320, %v1365
      %v1385 = vadd.f32 %v1321, %v1367
      %v1386 = vadd.f32 %v1322, %v1369
      %v1387 = vadd.f32 %v1323, %v1371
      %1388 = vst.msk [vmem:[#allocation4] sm:$0xff] %vm1291, %v1372
      %1389 = vst.msk [vmem:[#allocation4 + $0x8] sm:$0xff] %vm1291, %v1373
      %1390 = vst.msk [vmem:[#allocation4 + $0x10] sm:$0xff] %vm1291, %v1374
      %1391 = vst.msk [vmem:[#allocation4 + $0x18] sm:$0xff] %vm1291, %v1375
      %1392 = vst.msk [vmem:[#allocation4 + $0x20] sm:$0xff] %vm1291, %v1376
      %1393 = vst.msk [vmem:[#allocation4 + $0x28] sm:$0xff] %vm1291, %v1377
      %1394 = vst.msk [vmem:[#allocation4 + $0x30] sm:$0xff] %vm1291, %v1378
      %1395 = vst.msk [vmem:[#allocation4 + $0x38] sm:$0xff] %vm1291, %v1379
      %1396 = vst.msk [vmem:[#allocation4 + $0x40] sm:$0xff] %vm1291, %v1380
      %1397 = vst.msk [vmem:[#allocation4 + $0x48] sm:$0xff] %vm1291, %v1381
      %1398 = vst.msk [vmem:[#allocation4 + $0x50] sm:$0xff] %vm1291, %v1382
      %1399 = vst.msk [vmem:[#allocation4 + $0x58] sm:$0xff] %vm1291, %v1383
      %1400 = vst.msk [vmem:[#allocation4 + $0x60] sm:$0xff] %vm1291, %v1384
      %1401 = vst.msk [vmem:[#allocation4 + $0x68] sm:$0xff] %vm1291, %v1385
      %1402 = vst.msk [vmem:[#allocation4 + $0x70] sm:$0xff] %vm1291, %v1386
      %1403 = vst.msk [vmem:[#allocation4 + $0x78] sm:$0xff] %vm1291, %v1387
      %v1404 = vld [vmem:[#allocation5] sm:$0xff]
      %v1405 = vld [vmem:[#allocation5 + $0x8] sm:$0xff]
      %v1406 = vld [vmem:[#allocation5 + $0x10] sm:$0xff]
      %v1407 = vld [vmem:[#allocation5 + $0x18] sm:$0xff]
      %v1408 = vld [vmem:[#allocation5 + $0x20] sm:$0xff]
      %v1409 = vld [vmem:[#allocation5 + $0x28] sm:$0xff]
      %v1410 = vld [vmem:[#allocation5 + $0x30] sm:$0xff]
      %v1411 = vld [vmem:[#allocation5 + $0x38] sm:$0xff]
      %v1412 = vld [vmem:[#allocation5 + $0x40] sm:$0xff]
      %v1413 = vld [vmem:[#allocation5 + $0x48] sm:$0xff]
      %v1414 = vld [vmem:[#allocation5 + $0x50] sm:$0xff]
      %v1415 = vld [vmem:[#allocation5 + $0x58] sm:$0xff]
      %v1416 = vld [vmem:[#allocation5 + $0x60] sm:$0xff]
      %v1417 = vld [vmem:[#allocation5 + $0x68] sm:$0xff]
      %v1418 = vld [vmem:[#allocation5 + $0x70] sm:$0xff]
      %v1419 = vld [vmem:[#allocation5 + $0x78] sm:$0xff]
      %1420 = vadd.xlane.f32.xlu0 %v1195
      %v1421 = vpop.xlane.xlu0 %1420
      %1422 = vadd.xlane.f32.xlu0 %v1196
      %v1423 = vpop.xlane.xlu0 %1422
      %1424 = vadd.xlane.f32.xlu0 %v1197
      %v1425 = vpop.xlane.xlu0 %1424
      %1426 = vadd.xlane.f32.xlu0 %v1198
      %v1427 = vpop.xlane.xlu0 %1426
      %1428 = vadd.xlane.f32.xlu0 %v1199
      %v1429 = vpop.xlane.xlu0 %1428
      %1430 = vadd.xlane.f32.xlu0 %v1200
      %v1431 = vpop.xlane.xlu0 %1430
      %1432 = vadd.xlane.f32.xlu0 %v1201
      %v1433 = vpop.xlane.xlu0 %1432
      %1434 = vadd.xlane.f32.xlu0 %v1202
      %v1435 = vpop.xlane.xlu0 %1434
      %1436 = vadd.xlane.f32.xlu0 %v1203
      %v1437 = vpop.xlane.xlu0 %1436
      %1438 = vadd.xlane.f32.xlu0 %v1204
      %v1439 = vpop.xlane.xlu0 %1438
      %1440 = vadd.xlane.f32.xlu0 %v1205
      %v1441 = vpop.xlane.xlu0 %1440
      %1442 = vadd.xlane.f32.xlu0 %v1206
      %v1443 = vpop.xlane.xlu0 %1442
      %1444 = vadd.xlane.f32.xlu0 %v1207
      %v1445 = vpop.xlane.xlu0 %1444
      %1446 = vadd.xlane.f32.xlu0 %v1208
      %v1447 = vpop.xlane.xlu0 %1446
      %1448 = vadd.xlane.f32.xlu0 %v1209
      %v1449 = vpop.xlane.xlu0 %1448
      %1450 = vadd.xlane.f32.xlu0 %v1210
      %v1451 = vpop.xlane.xlu0 %1450
      %v1452 = vadd.f32 %v1404, %v1421
      %v1453 = vadd.f32 %v1405, %v1423
      %v1454 = vadd.f32 %v1406, %v1425
      %v1455 = vadd.f32 %v1407, %v1427
      %v1456 = vadd.f32 %v1408, %v1429
      %v1457 = vadd.f32 %v1409, %v1431
      %v1458 = vadd.f32 %v1410, %v1433
      %v1459 = vadd.f32 %v1411, %v1435
      %v1460 = vadd.f32 %v1412, %v1437
      %v1461 = vadd.f32 %v1413, %v1439
      %v1462 = vadd.f32 %v1414, %v1441
      %v1463 = vadd.f32 %v1415, %v1443
      %v1464 = vadd.f32 %v1416, %v1445
      %v1465 = vadd.f32 %v1417, %v1447
      %v1466 = vadd.f32 %v1418, %v1449
      %v1467 = vadd.f32 %v1419, %v1451
      %1468 = vst.msk [vmem:[#allocation5] sm:$0xff] %vm1291, %v1452
      %1469 = vst.msk [vmem:[#allocation5 + $0x8] sm:$0xff] %vm1291, %v1453
      %1470 = vst.msk [vmem:[#allocation5 + $0x10] sm:$0xff] %vm1291, %v1454
      %1471 = vst.msk [vmem:[#allocation5 + $0x18] sm:$0xff] %vm1291, %v1455
      %1472 = vst.msk [vmem:[#allocation5 + $0x20] sm:$0xff] %vm1291, %v1456
      %1473 = vst.msk [vmem:[#allocation5 + $0x28] sm:$0xff] %vm1291, %v1457
      %1474 = vst.msk [vmem:[#allocation5 + $0x30] sm:$0xff] %vm1291, %v1458
      %1475 = vst.msk [vmem:[#allocation5 + $0x38] sm:$0xff] %vm1291, %v1459
      %1476 = vst.msk [vmem:[#allocation5 + $0x40] sm:$0xff] %vm1291, %v1460
      %1477 = vst.msk [vmem:[#allocation5 + $0x48] sm:$0xff] %vm1291, %v1461
      %1478 = vst.msk [vmem:[#allocation5 + $0x50] sm:$0xff] %vm1291, %v1462
      %1479 = vst.msk [vmem:[#allocation5 + $0x58] sm:$0xff] %vm1291, %v1463
      %1480 = vst.msk [vmem:[#allocation5 + $0x60] sm:$0xff] %vm1291, %v1464
      %1481 = vst.msk [vmem:[#allocation5 + $0x68] sm:$0xff] %vm1291, %v1465
      %1482 = vst.msk [vmem:[#allocation5 + $0x70] sm:$0xff] %vm1291, %v1466
      %1483 = vst.msk [vmem:[#allocation5 + $0x78] sm:$0xff] %vm1291, %v1467
    $region45: #{cc_loss.1} parent=1 // pred_fallthru
      _
    %vm1484 = vcmask 7168
    %1485 = vst.msk [vmem:[#allocation2] sm:$0xff] %vm1484, %v365
    %1486 = vst.msk [vmem:[#allocation2 + $0x8] sm:$0xff] %vm1484, %v366
    %1487 = vst.msk [vmem:[#allocation2 + $0x10] sm:$0xff] %vm1484, %v367
    %1488 = vst.msk [vmem:[#allocation2 + $0x18] sm:$0xff] %vm1484, %v368
    %1489 = vst.msk [vmem:[#allocation2 + $0x20] sm:$0xff] %vm1484, %v369
    %1490 = vst.msk [vmem:[#allocation2 + $0x28] sm:$0xff] %vm1484, %v370
    %1491 = vst.msk [vmem:[#allocation2 + $0x30] sm:$0xff] %vm1484, %v371
    %1492 = vst.msk [vmem:[#allocation2 + $0x38] sm:$0xff] %vm1484, %v372
    %1493 = vst.msk [vmem:[#allocation2 + $0x40] sm:$0xff] %vm1484, %v373
    %1494 = vst.msk [vmem:[#allocation2 + $0x48] sm:$0xff] %vm1484, %v374
    %1495 = vst.msk [vmem:[#allocation2 + $0x50] sm:$0xff] %vm1484, %v375
    %1496 = vst.msk [vmem:[#allocation2 + $0x58] sm:$0xff] %vm1484, %v376
    %1497 = vst.msk [vmem:[#allocation2 + $0x60] sm:$0xff] %vm1484, %v377
    %1498 = vst.msk [vmem:[#allocation2 + $0x68] sm:$0xff] %vm1484, %v378
    %1499 = vst.msk [vmem:[#allocation2 + $0x70] sm:$0xff] %vm1484, %v379
    %1500 = vst.msk [vmem:[#allocation2 + $0x78] sm:$0xff] %vm1484, %v380
    // Predicated region
    $region46: #{cc_loss.1} parent=1 // pred_check
      %p1501 = pneg %p71
    $region47: #{cc_loss.1} parent=1 // pred_check_branch
      %1503 = sbr.rel (%p1501) target = $region49
    $region48: #{cc_loss.1} parent=1 // pred_region
      %v1504 = vld [vmem:[#allocation5] sm:$0xff]
      %v1505 = vld [vmem:[#allocation5 + $0x8] sm:$0xff]
      %v1506 = vld [vmem:[#allocation5 + $0x10] sm:$0xff]
      %v1507 = vld [vmem:[#allocation5 + $0x18] sm:$0xff]
      %v1508 = vld [vmem:[#allocation5 + $0x20] sm:$0xff]
      %v1509 = vld [vmem:[#allocation5 + $0x28] sm:$0xff]
      %v1510 = vld [vmem:[#allocation5 + $0x30] sm:$0xff]
      %v1511 = vld [vmem:[#allocation5 + $0x38] sm:$0xff]
      %v1512 = vld [vmem:[#allocation5 + $0x40] sm:$0xff]
      %v1513 = vld [vmem:[#allocation5 + $0x48] sm:$0xff]
      %v1514 = vld [vmem:[#allocation5 + $0x50] sm:$0xff]
      %v1515 = vld [vmem:[#allocation5 + $0x58] sm:$0xff]
      %v1516 = vld [vmem:[#allocation5 + $0x60] sm:$0xff]
      %v1517 = vld [vmem:[#allocation5 + $0x68] sm:$0xff]
      %v1518 = vld [vmem:[#allocation5 + $0x70] sm:$0xff]
      %v1519 = vld [vmem:[#allocation5 + $0x78] sm:$0xff]
      %v1520 = vld [vmem:[#allocation4] sm:$0xff]
      %v1521 = vld [vmem:[#allocation4 + $0x8] sm:$0xff]
      %v1522 = vld [vmem:[#allocation4 + $0x10] sm:$0xff]
      %v1523 = vld [vmem:[#allocation4 + $0x18] sm:$0xff]
      %v1524 = vld [vmem:[#allocation4 + $0x20] sm:$0xff]
      %v1525 = vld [vmem:[#allocation4 + $0x28] sm:$0xff]
      %v1526 = vld [vmem:[#allocation4 + $0x30] sm:$0xff]
      %v1527 = vld [vmem:[#allocation4 + $0x38] sm:$0xff]
      %v1528 = vld [vmem:[#allocation4 + $0x40] sm:$0xff]
      %v1529 = vld [vmem:[#allocation4 + $0x48] sm:$0xff]
      %v1530 = vld [vmem:[#allocation4 + $0x50] sm:$0xff]
      %v1531 = vld [vmem:[#allocation4 + $0x58] sm:$0xff]
      %v1532 = vld [vmem:[#allocation4 + $0x60] sm:$0xff]
      %v1533 = vld [vmem:[#allocation4 + $0x68] sm:$0xff]
      %v1534 = vld [vmem:[#allocation4 + $0x70] sm:$0xff]
      %v1535 = vld [vmem:[#allocation4 + $0x78] sm:$0xff]
      %v1536 = vld [vmem:[#allocation2] sm:$0xff]
      %v1537 = vld [vmem:[#allocation2 + $0x8] sm:$0xff]
      %v1538 = vld [vmem:[#allocation2 + $0x10] sm:$0xff]
      %v1539 = vld [vmem:[#allocation2 + $0x18] sm:$0xff]
      %v1540 = vld [vmem:[#allocation2 + $0x20] sm:$0xff]
      %v1541 = vld [vmem:[#allocation2 + $0x28] sm:$0xff]
      %v1542 = vld [vmem:[#allocation2 + $0x30] sm:$0xff]
      %v1543 = vld [vmem:[#allocation2 + $0x38] sm:$0xff]
      %v1544 = vld [vmem:[#allocation2 + $0x40] sm:$0xff]
      %v1545 = vld [vmem:[#allocation2 + $0x48] sm:$0xff]
      %v1546 = vld [vmem:[#allocation2 + $0x50] sm:$0xff]
      %v1547 = vld [vmem:[#allocation2 + $0x58] sm:$0xff]
      %v1548 = vld [vmem:[#allocation2 + $0x60] sm:$0xff]
      %v1549 = vld [vmem:[#allocation2 + $0x68] sm:$0xff]
      %v1550 = vld [vmem:[#allocation2 + $0x70] sm:$0xff]
      %v1551 = vld [vmem:[#allocation2 + $0x78] sm:$0xff]
      %v1552 = vld [vmem:[#allocation3] sm:$0xff]
      %v1553 = vld [vmem:[#allocation3 + $0x8] sm:$0xff]
      %v1554 = vld [vmem:[#allocation3 + $0x10] sm:$0xff]
      %v1555 = vld [vmem:[#allocation3 + $0x18] sm:$0xff]
      %v1556 = vld [vmem:[#allocation3 + $0x20] sm:$0xff]
      %v1557 = vld [vmem:[#allocation3 + $0x28] sm:$0xff]
      %v1558 = vld [vmem:[#allocation3 + $0x30] sm:$0xff]
      %v1559 = vld [vmem:[#allocation3 + $0x38] sm:$0xff]
      %v1560 = vld [vmem:[#allocation3 + $0x40] sm:$0xff]
      %v1561 = vld [vmem:[#allocation3 + $0x48] sm:$0xff]
      %v1562 = vld [vmem:[#allocation3 + $0x50] sm:$0xff]
      %v1563 = vld [vmem:[#allocation3 + $0x58] sm:$0xff]
      %v1564 = vld [vmem:[#allocation3 + $0x60] sm:$0xff]
      %v1565 = vld [vmem:[#allocation3 + $0x68] sm:$0xff]
      %v1566 = vld [vmem:[#allocation3 + $0x70] sm:$0xff]
      %v1567 = vld [vmem:[#allocation3 + $0x78] sm:$0xff]
      %v1568 = vlog2.pop %v1552
      %v1569 = vmul.f32 %v1568, 0.6931472
      %v1570 = vlog2.pop %v1553
      %v1571 = vmul.f32 %v1570, 0.6931472
      %v1572 = vlog2.pop %v1554
      %v1573 = vmul.f32 %v1572, 0.6931472
      %v1574 = vlog2.pop %v1555
      %v1575 = vmul.f32 %v1574, 0.6931472
      %v1576 = vlog2.pop %v1556
      %v1577 = vmul.f32 %v1576, 0.6931472
      %v1578 = vlog2.pop %v1557
      %v1579 = vmul.f32 %v1578, 0.6931472
      %v1580 = vlog2.pop %v1558
      %v1581 = vmul.f32 %v1580, 0.6931472
      %v1582 = vlog2.pop %v1559
      %v1583 = vmul.f32 %v1582, 0.6931472
      %v1584 = vlog2.pop %v1560
      %v1585 = vmul.f32 %v1584, 0.6931472
      %v1586 = vlog2.pop %v1561
      %v1587 = vmul.f32 %v1586, 0.6931472
      %v1588 = vlog2.pop %v1562
      %v1589 = vmul.f32 %v1588, 0.6931472
      %v1590 = vlog2.pop %v1563
      %v1591 = vmul.f32 %v1590, 0.6931472
      %v1592 = vlog2.pop %v1564
      %v1593 = vmul.f32 %v1592, 0.6931472
      %v1594 = vlog2.pop %v1565
      %v1595 = vmul.f32 %v1594, 0.6931472
      %v1596 = vlog2.pop %v1566
      %v1597 = vmul.f32 %v1596, 0.6931472
      %v1598 = vlog2.pop %v1567
      %v1599 = vmul.f32 %v1598, 0.6931472
      %v1600 = vadd.f32 %v1536, %v1569
      %v1601 = vadd.f32 %v1537, %v1571
      %v1602 = vadd.f32 %v1538, %v1573
      %v1603 = vadd.f32 %v1539, %v1575
      %v1604 = vadd.f32 %v1540, %v1577
      %v1605 = vadd.f32 %v1541, %v1579
      %v1606 = vadd.f32 %v1542, %v1581
      %v1607 = vadd.f32 %v1543, %v1583
      %v1608 = vadd.f32 %v1544, %v1585
      %v1609 = vadd.f32 %v1545, %v1587
      %v1610 = vadd.f32 %v1546, %v1589
      %v1611 = vadd.f32 %v1547, %v1591
      %v1612 = vadd.f32 %v1548, %v1593
      %v1613 = vadd.f32 %v1549, %v1595
      %v1614 = vadd.f32 %v1550, %v1597
      %v1615 = vadd.f32 %v1551, %v1599
      %v1616 = vmul.f32 %v1504, %v1600
      %v1617 = vmul.f32 %v1505, %v1601
      %v1618 = vmul.f32 %v1506, %v1602
      %v1619 = vmul.f32 %v1507, %v1603
      %v1620 = vmul.f32 %v1508, %v1604
      %v1621 = vmul.f32 %v1509, %v1605
      %v1622 = vmul.f32 %v1510, %v1606
      %v1623 = vmul.f32 %v1511, %v1607
      %v1624 = vmul.f32 %v1512, %v1608
      %v1625 = vmul.f32 %v1513, %v1609
      %v1626 = vmul.f32 %v1514, %v1610
      %v1627 = vmul.f32 %v1515, %v1611
      %v1628 = vmul.f32 %v1516, %v1612
      %v1629 = vmul.f32 %v1517, %v1613
      %v1630 = vmul.f32 %v1518, %v1614
      %v1631 = vmul.f32 %v1519, %v1615
      %v1632 = vsub.f32 %v1520, %v1616
      %v1633 = vsub.f32 %v1521, %v1617
      %v1634 = vsub.f32 %v1522, %v1618
      %v1635 = vsub.f32 %v1523, %v1619
      %v1636 = vsub.f32 %v1524, %v1620
      %v1637 = vsub.f32 %v1525, %v1621
      %v1638 = vsub.f32 %v1526, %v1622
      %v1639 = vsub.f32 %v1527, %v1623
      %v1640 = vsub.f32 %v1528, %v1624
      %v1641 = vsub.f32 %v1529, %v1625
      %v1642 = vsub.f32 %v1530, %v1626
      %v1643 = vsub.f32 %v1531, %v1627
      %v1644 = vsub.f32 %v1532, %v1628
      %v1645 = vsub.f32 %v1533, %v1629
      %v1646 = vsub.f32 %v1534, %v1630
      %v1647 = vsub.f32 %v1535, %v1631
      %v1648 = vadd.f32 %v1504, 1e-12
      %v1649 = vadd.f32 %v1505, 1e-12
      %v1650 = vadd.f32 %v1506, 1e-12
      %v1651 = vadd.f32 %v1507, 1e-12
      %v1652 = vadd.f32 %v1508, 1e-12
      %v1653 = vadd.f32 %v1509, 1e-12
      %v1654 = vadd.f32 %v1510, 1e-12
      %v1655 = vadd.f32 %v1511, 1e-12
      %v1656 = vadd.f32 %v1512, 1e-12
      %v1657 = vadd.f32 %v1513, 1e-12
      %v1658 = vadd.f32 %v1514, 1e-12
      %v1659 = vadd.f32 %v1515, 1e-12
      %v1660 = vadd.f32 %v1516, 1e-12
      %v1661 = vadd.f32 %v1517, 1e-12
      %v1662 = vadd.f32 %v1518, 1e-12
      %v1663 = vadd.f32 %v1519, 1e-12
      %v1664 = vrcp.pop %v1648
      %v1665 = vmul.f32 %v1632, %v1664
      %v1666 = vrcp.pop %v1649
      %v1667 = vmul.f32 %v1633, %v1666
      %v1668 = vrcp.pop %v1650
      %v1669 = vmul.f32 %v1634, %v1668
      %v1670 = vrcp.pop %v1651
      %v1671 = vmul.f32 %v1635, %v1670
      %v1672 = vrcp.pop %v1652
      %v1673 = vmul.f32 %v1636, %v1672
      %v1674 = vrcp.pop %v1653
      %v1675 = vmul.f32 %v1637, %v1674
      %v1676 = vrcp.pop %v1654
      %v1677 = vmul.f32 %v1638, %v1676
      %v1678 = vrcp.pop %v1655
      %v1679 = vmul.f32 %v1639, %v1678
      %v1680 = vrcp.pop %v1656
      %v1681 = vmul.f32 %v1640, %v1680
      %v1682 = vrcp.pop %v1657
      %v1683 = vmul.f32 %v1641, %v1682
      %v1684 = vrcp.pop %v1658
      %v1685 = vmul.f32 %v1642, %v1684
      %v1686 = vrcp.pop %v1659
      %v1687 = vmul.f32 %v1643, %v1686
      %v1688 = vrcp.pop %v1660
      %v1689 = vmul.f32 %v1644, %v1688
      %v1690 = vrcp.pop %v1661
      %v1691 = vmul.f32 %v1645, %v1690
      %v1692 = vrcp.pop %v1662
      %v1693 = vmul.f32 %v1646, %v1692
      %v1694 = vrcp.pop %v1663
      %v1695 = vmul.f32 %v1647, %v1694
      %v1696 = vmul.f32 %v1665, -1.4285715
      %v1697 = vmul.f32 %v1667, -1.4285715
      %v1698 = vmul.f32 %v1669, -1.4285715
      %v1699 = vmul.f32 %v1671, -1.4285715
      %v1700 = vmul.f32 %v1673, -1.4285715
      %v1701 = vmul.f32 %v1675, -1.4285715
      %v1702 = vmul.f32 %v1677, -1.4285715
      %v1703 = vmul.f32 %v1679, -1.4285715
      %v1704 = vmul.f32 %v1681, -1.4285715
      %v1705 = vmul.f32 %v1683, -1.4285715
      %v1706 = vmul.f32 %v1685, -1.4285715
      %v1707 = vmul.f32 %v1687, -1.4285715
      %v1708 = vmul.f32 %v1689, -1.4285715
      %v1709 = vmul.f32 %v1691, -1.4285715
      %v1710 = vmul.f32 %v1693, -1.4285715
      %v1711 = vmul.f32 %v1695, -1.4285715
      %1713 = vset.pattern.permute.xlu0 0
      %1714 = vperm.xlu0 %1713, %v1696
      %v1715 = vpop.permute.xlu0 %1714
      %1718 = vset.pattern.permute.xlu0 0
      %1719 = vperm.xlu0 %1718, %v1697
      %v1720 = vpop.permute.xlu0 %1719
      %1723 = vset.pattern.permute.xlu0 0
      %1724 = vperm.xlu0 %1723, %v1698
      %v1725 = vpop.permute.xlu0 %1724
      %1728 = vset.pattern.permute.xlu0 0
      %1729 = vperm.xlu0 %1728, %v1699
      %v1730 = vpop.permute.xlu0 %1729
      %1733 = vset.pattern.permute.xlu0 0
      %1734 = vperm.xlu0 %1733, %v1700
      %v1735 = vpop.permute.xlu0 %1734
      %1738 = vset.pattern.permute.xlu0 0
      %1739 = vperm.xlu0 %1738, %v1701
      %v1740 = vpop.permute.xlu0 %1739
      %1743 = vset.pattern.permute.xlu0 0
      %1744 = vperm.xlu0 %1743, %v1702
      %v1745 = vpop.permute.xlu0 %1744
      %1748 = vset.pattern.permute.xlu0 0
      %1749 = vperm.xlu0 %1748, %v1703
      %v1750 = vpop.permute.xlu0 %1749
      %1753 = vset.pattern.permute.xlu0 0
      %1754 = vperm.xlu0 %1753, %v1704
      %v1755 = vpop.permute.xlu0 %1754
      %1758 = vset.pattern.permute.xlu0 0
      %1759 = vperm.xlu0 %1758, %v1705
      %v1760 = vpop.permute.xlu0 %1759
      %1763 = vset.pattern.permute.xlu0 0
      %1764 = vperm.xlu0 %1763, %v1706
      %v1765 = vpop.permute.xlu0 %1764
      %1768 = vset.pattern.permute.xlu0 0
      %1769 = vperm.xlu0 %1768, %v1707
      %v1770 = vpop.permute.xlu0 %1769
      %1773 = vset.pattern.permute.xlu0 0
      %1774 = vperm.xlu0 %1773, %v1708
      %v1775 = vpop.permute.xlu0 %1774
      %1778 = vset.pattern.permute.xlu0 0
      %1779 = vperm.xlu0 %1778, %v1709
      %v1780 = vpop.permute.xlu0 %1779
      %1783 = vset.pattern.permute.xlu0 0
      %1784 = vperm.xlu0 %1783, %v1710
      %v1785 = vpop.permute.xlu0 %1784
      %1788 = vset.pattern.permute.xlu0 0
      %1789 = vperm.xlu0 %1788, %v1711
      %v1790 = vpop.permute.xlu0 %1789
      %1792 = vst [vmem:[#allocation14] sm:$0xff] %v1715
      %1793 = vst [vmem:[#allocation14 + $0x8] sm:$0xff] %v1720
      %1794 = vst [vmem:[#allocation14 + $0x10] sm:$0xff] %v1725
      %1795 = vst [vmem:[#allocation14 + $0x18] sm:$0xff] %v1730
      %1796 = vst [vmem:[#allocation14 + $0x20] sm:$0xff] %v1735
      %1797 = vst [vmem:[#allocation14 + $0x28] sm:$0xff] %v1740
      %1798 = vst [vmem:[#allocation14 + $0x30] sm:$0xff] %v1745
      %1799 = vst [vmem:[#allocation14 + $0x38] sm:$0xff] %v1750
      %1800 = vst [vmem:[#allocation14 + $0x40] sm:$0xff] %v1755
      %1801 = vst [vmem:[#allocation14 + $0x48] sm:$0xff] %v1760
      %1802 = vst [vmem:[#allocation14 + $0x50] sm:$0xff] %v1765
      %1803 = vst [vmem:[#allocation14 + $0x58] sm:$0xff] %v1770
      %1804 = vst [vmem:[#allocation14 + $0x60] sm:$0xff] %v1775
      %1805 = vst [vmem:[#allocation14 + $0x68] sm:$0xff] %v1780
      %1806 = vst [vmem:[#allocation14 + $0x70] sm:$0xff] %v1785
      %1807 = vst [vmem:[#allocation14 + $0x78] sm:$0xff] %v1790
    $region49: #{cc_loss.1} parent=1 // pred_fallthru
      _
    // Predicated region
    $region50: #{cc_loss.1} parent=1 // pred_check
      _
    $region51: #{cc_loss.1} parent=1 // pred_check_branch
      %1809 = sbr.rel (0) target = $region53
    $region52: #{cc_loss.1} parent=1 // pred_region
      %s1811 = ssub.s32 2048, 2048
      %1812 = vsyncadd [#allocation8], %s1811
      %s1813 = sshll.u32 [#allocation14], 4
      %s1814 = int_to_ptr.vmem [resolvable:$true] %s1813
      %1819 = dma.vmem_to_hbm [thread:$0]  %s1814, 2048, %s4, [#allocation8], 128, 128, 8
    $region53: #{cc_loss.1} parent=1 // pred_fallthru
      _
    // Predicated region
    $region54: #{cc_loss.1} parent=1 // pred_check
      _
    $region55: #{cc_loss.1} parent=1 // pred_check_branch
      %1821 = sbr.rel (0) target = $region57
    $region56: #{cc_loss.1} parent=1 // pred_region
      %1822 = dma.done [#allocation8], 2048
    $region57: #{cc_loss.1} parent=1 // pred_fallthru
      _
    %1823 = vsyncpa [#allocation7], 1
    %1824 = vsyncpa [#allocation10], 1
    %1825 = vsyncpa [#allocation13], 1
    %1826 = vsyncpa [#allocation8], 1

</llo_original>
